<compile_context>
chip_gen: v7x
topology: tpu7x:2x2x1
jax: 0.10.0
libtpu: 0.0.40
codegen_flags: <defaults>
</compile_context>

<pallas_src>
import functools

import jax
import jax.numpy as jnp
from jax.experimental import pallas as pl
from jax.experimental.pallas import tpu as pltpu


def _group_kernel(x_ref, w1_ref, b1_ref, w2_ref, b2_ref, o_ref,
                  *, cin, cout, h, w, k, p):
    """Fused [1x1 conv + MFM] -> [kxk 'same' conv + MFM] for one image.

    x_ref : (1, cin, h*w)        w1_ref: (2*cin, cin)   b1_ref: (2*cin, 1)
    w2_ref: (k*k, 2*cout, cin)   b2_ref: (2*cout, 1)    o_ref : (1, cout, h*w)
    """
    hw = h * w
    x = x_ref[0]                                               # (cin, hw)

    # ---- stage 1: conv_a = 1x1 conv (pure channel matmul) + MFM ----------
    h1 = jnp.dot(w1_ref[...], x,
                 preferred_element_type=jnp.float32) + b1_ref[...]   # (2cin, hw)
    y1 = jnp.maximum(h1[:cin, :], h1[cin:, :])                 # (cin, hw)

    # ---- stage 2: kxk conv, stride 1, pad p (= 'same'), + MFM ------------
    # Zero-pad the flattened pixel axis by p image-rows (+p lanes) per side;
    # each kernel tap (kh, kw) is then a static lane-shifted view of y1p.
    pad = p * w + p
    zpad = jnp.zeros((cin, pad), jnp.float32)
    y1p = jnp.concatenate([zpad, y1, zpad], axis=1)            # (cin, hw + 2*pad)

    # Column coordinate of every output pixel, used to mask the lanes that
    # would otherwise wrap around to the previous / next image row.
    col = jax.lax.broadcasted_iota(jnp.int32, (1, hw), 1) % w

    acc = jnp.zeros((2 * cout, hw), jnp.float32)
    for kh in range(k):
        for kw in range(k):
            off = kh * w + kw
            v = y1p[:, off:off + hw]                           # (cin, hw)
            lo = p - kw                 # tap is valid iff lo <= col < hi
            hi = w + p - kw
            if lo > 0 or hi < w:
                valid = jnp.logical_and(col >= lo, col < hi)
                v = jnp.where(valid, v, 0.0)
            acc = acc + jnp.dot(w2_ref[kh * k + kw], v,
                                preferred_element_type=jnp.float32)
    acc = acc + b2_ref[...]                                    # (2cout, hw)
    o_ref[0] = jnp.maximum(acc[:cout, :], acc[cout:, :]).astype(o_ref.dtype)


def group_forward(x, w1, b1, w2, b2, *, kernel_size=3, stride=1, padding=1):
    """Forward pass of `group` in NCHW, matching PyTorch semantics.

    x : (N, Cin, H, W) f32
    w1: (2*Cin, Cin, 1, 1)   b1: (2*Cin,)     -- conv_a (mfm, 1x1)
    w2: (2*Cout, Cin, k, k)  b2: (2*Cout,)    -- conv   (mfm, kxk)
    returns (N, Cout, H, W) f32
    """
    N, Cin, H, W = x.shape
    Cout = w2.shape[0] // 2
    k = kernel_size
    if stride != 1 or 2 * padding != k - 1:
        raise NotImplementedError(
            "Pallas kernel implements the stride-1 'same' configuration.")
    HW = H * W
    KK = k * k

    # Free reshapes only: NCHW stays NCHW, no HBM transpose pass.
    x_flat = x.reshape(N, Cin, HW).astype(jnp.float32)
    w1m = w1.reshape(2 * Cin, Cin).astype(jnp.float32)
    b1m = b1.reshape(2 * Cin, 1).astype(jnp.float32)
    # (2Cout, Cin, k, k) -> (k, k, 2Cout, Cin) -> (k*k, 2Cout, Cin); tap index kh*k+kw.
    w2m = jnp.transpose(w2, (2, 3, 0, 1)).reshape(KK, 2 * Cout, Cin).astype(jnp.float32)
    b2m = b2.reshape(2 * Cout, 1).astype(jnp.float32)

    kernel = functools.partial(_group_kernel, cin=Cin, cout=Cout,
                               h=H, w=W, k=k, p=padding)

    flops = 2 * N * HW * (Cin * 2 * Cin + KK * Cin * 2 * Cout)
    bytes_accessed = 4 * (x_flat.size + w1m.size + b1m.size + w2m.size
                          + b2m.size + N * Cout * HW)

    out = pl.pallas_call(
        kernel,
        out_shape=jax.ShapeDtypeStruct((N, Cout, HW), jnp.float32),
        grid_spec=pltpu.PrefetchScalarGridSpec(
            num_scalar_prefetch=0,
            grid=(N,),
            in_specs=[
                pl.BlockSpec((1, Cin, HW), lambda n: (n, 0, 0)),        # x (per image)
                pl.BlockSpec((2 * Cin, Cin), lambda n: (0, 0)),         # w1 (constant)
                pl.BlockSpec((2 * Cin, 1), lambda n: (0, 0)),           # b1
                pl.BlockSpec((KK, 2 * Cout, Cin), lambda n: (0, 0, 0)),  # w2
                pl.BlockSpec((2 * Cout, 1), lambda n: (0, 0)),          # b2
            ],
            out_specs=pl.BlockSpec((1, Cout, HW), lambda n: (n, 0, 0)),
        ),
        compiler_params=pltpu.CompilerParams(
            dimension_semantics=("parallel",)),
        cost_estimate=pl.CostEstimate(
            flops=flops, transcendentals=0, bytes_accessed=bytes_accessed),
    )(x_flat, w1m, b1m, w2m, b2m)

    return out.reshape(N, Cout, H, W)


def _reference(x, w1, b1, w2, b2, *, stride, padding):
    """Pure-JAX reference matching the PyTorch `group` module."""
    def mfm_conv(inp, wt, bs, s, p):
        y = jax.lax.conv_general_dilated(
            inp, wt, window_strides=(s, s), padding=((p, p), (p, p)),
            dimension_numbers=("NCHW", "OIHW", "NCHW"))
        y = y + bs.reshape(1, -1, 1, 1)
        c = y.shape[1] // 2
        return jnp.maximum(y[:, :c], y[:, c:])
    y = mfm_conv(x, w1, b1, 1, 0)          # conv_a: 1x1, stride 1, pad 0
    return mfm_conv(y, w2, b2, stride, padding)


if __name__ == "__main__":
    in_channels, out_channels = 4, 8
    kernel_size, stride, padding = 3, 1, 1
    N, H, W = 2, 16, 16

    key = jax.random.PRNGKey(0)
    kx, kw1, kb1, kw2, kb2 = jax.random.split(key, 5)

    x = jax.random.normal(kx, (N, in_channels, H, W), dtype=jnp.float32)

    # Deterministic params (PyTorch Conv2d default-init shapes/bounds).
    fan1 = in_channels * 1 * 1
    bnd1 = 1.0 / (fan1 ** 0.5)
    w1 = jax.random.uniform(kw1, (2 * in_channels, in_channels, 1, 1),
                            minval=-bnd1, maxval=bnd1, dtype=jnp.float32)
    b1 = jax.random.uniform(kb1, (2 * in_channels,),
                            minval=-bnd1, maxval=bnd1, dtype=jnp.float32)

    fan2 = in_channels * kernel_size * kernel_size
    bnd2 = 1.0 / (fan2 ** 0.5)
    w2 = jax.random.uniform(kw2, (2 * out_channels, in_channels,
                                  kernel_size, kernel_size),
                            minval=-bnd2, maxval=bnd2, dtype=jnp.float32)
    b2 = jax.random.uniform(kb2, (2 * out_channels,),
                            minval=-bnd2, maxval=bnd2, dtype=jnp.float32)

    out = group_forward(x, w1, b1, w2, b2, kernel_size=kernel_size,
                        stride=stride, padding=padding)
    out = jax.block_until_ready(out)

    ref = jax.block_until_ready(
        _reference(x, w1, b1, w2, b2, stride=stride, padding=padding))

    assert out.shape == (N, out_channels, H, W), out.shape
    max_err = float(jnp.max(jnp.abs(out - ref)))
    assert jnp.allclose(out, ref, atol=1e-4, rtol=1e-4), max_err

    print("KERNEL_OK")
</pallas_src>

<mosaic_0001>
module attributes {stable_mosaic.version = 11 : i64} {
  func.func @_group_kernel(%arg0: i32, %arg1: memref<1x4x256xf32, #tpu.memory_space<vmem>>, %arg2: memref<8x4xf32, #tpu.memory_space<vmem>>, %arg3: memref<8x1xf32, #tpu.memory_space<vmem>>, %arg4: memref<9x16x4xf32, #tpu.memory_space<vmem>>, %arg5: memref<16x1xf32, #tpu.memory_space<vmem>>, %arg6: memref<1x8x256xf32, #tpu.memory_space<vmem>>) attributes {dimension_semantics = [#tpu.dimension_semantics<parallel>], iteration_bounds = array<i64: 2>, scalar_prefetch = 0 : i64, scratch_operands = 0 : i64, tpu.core_type = #tpu.core_type<tc>, window_params = [{transform_indices = @transform_0, window_bounds = array<i64: 1, 4, 256>}, {pipeline_mode = #tpu.pipeline_mode<synchronous>, transform_indices = @transform_1, window_bounds = array<i64: 8, 4>}, {pipeline_mode = #tpu.pipeline_mode<synchronous>, transform_indices = @transform_2, window_bounds = array<i64: 8, 1>}, {pipeline_mode = #tpu.pipeline_mode<synchronous>, transform_indices = @transform_3, window_bounds = array<i64: 9, 16, 4>}, {pipeline_mode = #tpu.pipeline_mode<synchronous>, transform_indices = @transform_4, window_bounds = array<i64: 16, 1>}, {transform_indices = @transform_5, window_bounds = array<i64: 1, 8, 256>}]} {
    %c0 = arith.constant 0 : index
    %c0_0 = arith.constant 0 : index
    %c0_1 = arith.constant 0 : index
    %0 = vector.load %arg1[%c0, %c0_0, %c0_1] : memref<1x4x256xf32, #tpu.memory_space<vmem>>, vector<1x4x256xf32>
    %1 = vector.shape_cast %0 : vector<1x4x256xf32> to vector<4x256xf32>
    %c0_2 = arith.constant 0 : index
    %c0_3 = arith.constant 0 : index
    %2 = vector.load %arg2[%c0_2, %c0_3] : memref<8x4xf32, #tpu.memory_space<vmem>>, vector<8x4xf32>
    %cst = arith.constant dense<0.000000e+00> : vector<8x256xf32>
    %3 = tpu.matmul %2, %1, %cst {dimension_numbers = #tpu.dot_dimension_numbers<[1], [0], [0], [1], [0, 0, 1, 1], [], []>} : vector<8x4xf32>, vector<4x256xf32>, vector<8x256xf32> -> vector<8x256xf32>
    %c0_4 = arith.constant 0 : index
    %c0_5 = arith.constant 0 : index
    %4 = vector.load %arg3[%c0_4, %c0_5] : memref<8x1xf32, #tpu.memory_space<vmem>>, vector<8x1xf32>
    %5 = vector.broadcast %4 : vector<8x1xf32> to vector<8x256xf32>
    %6 = arith.addf %3, %5 : vector<8x256xf32>
    %7 = vector.extract_strided_slice %6 {offsets = [0, 0], sizes = [4, 256], strides = [1, 1]} : vector<8x256xf32> to vector<4x256xf32>
    %8 = vector.extract_strided_slice %6 {offsets = [4, 0], sizes = [4, 256], strides = [1, 1]} : vector<8x256xf32> to vector<4x256xf32>
    %9 = arith.maximumf %7, %8 : vector<4x256xf32>
    %cst_6 = arith.constant 0.000000e+00 : f32
    %10 = vector.broadcast %cst_6 : f32 to vector<4x17xf32>
    %11 = tpu.concatenate %10, %9, %10 in 1 : vector<4x17xf32>, vector<4x256xf32>, vector<4x17xf32> -> vector<4x290xf32>
    %12 = tpu.iota {dimensions = array<i32: 1>} : vector<1x256xi32>
    %c16_i32 = arith.constant 16 : i32
    %c0_i32 = arith.constant 0 : i32
    %13 = arith.cmpi eq, %c16_i32, %c0_i32 : i32
    %c1_i32 = arith.constant 1 : i32
    %14 = arith.select %13, %c1_i32, %c16_i32 : i32
    %15 = vector.broadcast %14 : i32 to vector<1x256xi32>
    %16 = arith.remsi %12, %15 : vector<1x256xi32>
    %c0_i32_7 = arith.constant 0 : i32
    %17 = vector.broadcast %c0_i32_7 : i32 to vector<1x256xi32>
    %18 = arith.cmpi ne, %16, %17 : vector<1x256xi32>
    %c0_i32_8 = arith.constant 0 : i32
    %19 = vector.broadcast %c0_i32_8 : i32 to vector<1x256xi32>
    %20 = arith.cmpi slt, %16, %19 : vector<1x256xi32>
    %c0_i32_9 = arith.constant 0 : i32
    %21 = arith.cmpi slt, %14, %c0_i32_9 : i32
    %22 = vector.broadcast %21 : i1 to vector<1x256xi1>
    %23 = vector.broadcast %22 : vector<1x256xi1> to vector<1x256xi1>
    %24 = arith.xori %20, %23 : vector<1x256xi1>
    %25 = arith.andi %24, %18 : vector<1x256xi1>
    %26 = vector.broadcast %14 : i32 to vector<1x256xi32>
    %27 = arith.addi %16, %26 : vector<1x256xi32>
    %28 = arith.select %25, %27, %16 : vector<1x256xi1>, vector<1x256xi32>
    %cst_10 = arith.constant 0.000000e+00 : f32
    %29 = vector.broadcast %cst_10 : f32 to vector<16x256xf32>
    %30 = vector.extract_strided_slice %11 {offsets = [0, 0], sizes = [4, 256], strides = [1, 1]} : vector<4x290xf32> to vector<4x256xf32>
    %c1_i32_11 = arith.constant 1 : i32
    %31 = vector.broadcast %c1_i32_11 : i32 to vector<1x256xi32>
    %32 = arith.cmpi sge, %28, %31 : vector<1x256xi32>
    %c17_i32 = arith.constant 17 : i32
    %33 = vector.broadcast %c17_i32 : i32 to vector<1x256xi32>
    %34 = arith.cmpi slt, %28, %33 : vector<1x256xi32>
    %35 = arith.andi %32, %34 : vector<1x256xi1>
    %cst_12 = arith.constant 0.000000e+00 : f32
    %36 = vector.shape_cast %35 : vector<1x256xi1> to vector<1x256xi1>
    %37 = vector.broadcast %36 : vector<1x256xi1> to vector<4x256xi1>
    %38 = vector.broadcast %cst_12 : f32 to vector<4x256xf32>
    %39 = arith.select %37, %30, %38 : vector<4x256xi1>, vector<4x256xf32>
    %c0_13 = arith.constant 0 : index
    %c0_14 = arith.constant 0 : index
    %c0_15 = arith.constant 0 : index
    %40 = vector.load %arg4[%c0_13, %c0_14, %c0_15] : memref<9x16x4xf32, #tpu.memory_space<vmem>>, vector<1x16x4xf32>
    %41 = vector.shape_cast %40 : vector<1x16x4xf32> to vector<16x4xf32>
    %cst_16 = arith.constant dense<0.000000e+00> : vector<16x256xf32>
    %42 = tpu.matmul %41, %39, %cst_16 {dimension_numbers = #tpu.dot_dimension_numbers<[1], [0], [0], [1], [0, 0, 1, 1], [], []>} : vector<16x4xf32>, vector<4x256xf32>, vector<16x256xf32> -> vector<16x256xf32>
    %43 = arith.addf %29, %42 : vector<16x256xf32>
    %44 = vector.extract_strided_slice %11 {offsets = [0, 1], sizes = [4, 256], strides = [1, 1]} : vector<4x290xf32> to vector<4x256xf32>
    %c1 = arith.constant 1 : index
    %c0_17 = arith.constant 0 : index
    %c0_18 = arith.constant 0 : index
    %45 = vector.load %arg4[%c1, %c0_17, %c0_18] : memref<9x16x4xf32, #tpu.memory_space<vmem>>, vector<1x16x4xf32>
    %46 = vector.shape_cast %45 : vector<1x16x4xf32> to vector<16x4xf32>
    %cst_19 = arith.constant dense<0.000000e+00> : vector<16x256xf32>
    %47 = tpu.matmul %46, %44, %cst_19 {dimension_numbers = #tpu.dot_dimension_numbers<[1], [0], [0], [1], [0, 0, 1, 1], [], []>} : vector<16x4xf32>, vector<4x256xf32>, vector<16x256xf32> -> vector<16x256xf32>
    %48 = arith.addf %43, %47 : vector<16x256xf32>
    %49 = vector.extract_strided_slice %11 {offsets = [0, 2], sizes = [4, 256], strides = [1, 1]} : vector<4x290xf32> to vector<4x256xf32>
    %c-1_i32 = arith.constant -1 : i32
    %50 = vector.broadcast %c-1_i32 : i32 to vector<1x256xi32>
    %51 = arith.cmpi sge, %28, %50 : vector<1x256xi32>
    %c15_i32 = arith.constant 15 : i32
    %52 = vector.broadcast %c15_i32 : i32 to vector<1x256xi32>
    %53 = arith.cmpi slt, %28, %52 : vector<1x256xi32>
    %54 = arith.andi %51, %53 : vector<1x256xi1>
    %cst_20 = arith.constant 0.000000e+00 : f32
    %55 = vector.shape_cast %54 : vector<1x256xi1> to vector<1x256xi1>
    %56 = vector.broadcast %55 : vector<1x256xi1> to vector<4x256xi1>
    %57 = vector.broadcast %cst_20 : f32 to vector<4x256xf32>
    %58 = arith.select %56, %49, %57 : vector<4x256xi1>, vector<4x256xf32>
    %c2 = arith.constant 2 : index
    %c0_21 = arith.constant 0 : index
    %c0_22 = arith.constant 0 : index
    %59 = vector.load %arg4[%c2, %c0_21, %c0_22] : memref<9x16x4xf32, #tpu.memory_space<vmem>>, vector<1x16x4xf32>
    %60 = vector.shape_cast %59 : vector<1x16x4xf32> to vector<16x4xf32>
    %cst_23 = arith.constant dense<0.000000e+00> : vector<16x256xf32>
    %61 = tpu.matmul %60, %58, %cst_23 {dimension_numbers = #tpu.dot_dimension_numbers<[1], [0], [0], [1], [0, 0, 1, 1], [], []>} : vector<16x4xf32>, vector<4x256xf32>, vector<16x256xf32> -> vector<16x256xf32>
    %62 = arith.addf %48, %61 : vector<16x256xf32>
    %63 = vector.extract_strided_slice %11 {offsets = [0, 16], sizes = [4, 256], strides = [1, 1]} : vector<4x290xf32> to vector<4x256xf32>
    %c1_i32_24 = arith.constant 1 : i32
    %64 = vector.broadcast %c1_i32_24 : i32 to vector<1x256xi32>
    %65 = arith.cmpi sge, %28, %64 : vector<1x256xi32>
    %c17_i32_25 = arith.constant 17 : i32
    %66 = vector.broadcast %c17_i32_25 : i32 to vector<1x256xi32>
    %67 = arith.cmpi slt, %28, %66 : vector<1x256xi32>
    %68 = arith.andi %65, %67 : vector<1x256xi1>
    %cst_26 = arith.constant 0.000000e+00 : f32
    %69 = vector.shape_cast %68 : vector<1x256xi1> to vector<1x256xi1>
    %70 = vector.broadcast %69 : vector<1x256xi1> to vector<4x256xi1>
    %71 = vector.broadcast %cst_26 : f32 to vector<4x256xf32>
    %72 = arith.select %70, %63, %71 : vector<4x256xi1>, vector<4x256xf32>
    %c3 = arith.constant 3 : index
    %c0_27 = arith.constant 0 : index
    %c0_28 = arith.constant 0 : index
    %73 = vector.load %arg4[%c3, %c0_27, %c0_28] : memref<9x16x4xf32, #tpu.memory_space<vmem>>, vector<1x16x4xf32>
    %74 = vector.shape_cast %73 : vector<1x16x4xf32> to vector<16x4xf32>
    %cst_29 = arith.constant dense<0.000000e+00> : vector<16x256xf32>
    %75 = tpu.matmul %74, %72, %cst_29 {dimension_numbers = #tpu.dot_dimension_numbers<[1], [0], [0], [1], [0, 0, 1, 1], [], []>} : vector<16x4xf32>, vector<4x256xf32>, vector<16x256xf32> -> vector<16x256xf32>
    %76 = arith.addf %62, %75 : vector<16x256xf32>
    %77 = vector.extract_strided_slice %11 {offsets = [0, 17], sizes = [4, 256], strides = [1, 1]} : vector<4x290xf32> to vector<4x256xf32>
    %c4 = arith.constant 4 : index
    %c0_30 = arith.constant 0 : index
    %c0_31 = arith.constant 0 : index
    %78 = vector.load %arg4[%c4, %c0_30, %c0_31] : memref<9x16x4xf32, #tpu.memory_space<vmem>>, vector<1x16x4xf32>
    %79 = vector.shape_cast %78 : vector<1x16x4xf32> to vector<16x4xf32>
    %cst_32 = arith.constant dense<0.000000e+00> : vector<16x256xf32>
    %80 = tpu.matmul %79, %77, %cst_32 {dimension_numbers = #tpu.dot_dimension_numbers<[1], [0], [0], [1], [0, 0, 1, 1], [], []>} : vector<16x4xf32>, vector<4x256xf32>, vector<16x256xf32> -> vector<16x256xf32>
    %81 = arith.addf %76, %80 : vector<16x256xf32>
    %82 = vector.extract_strided_slice %11 {offsets = [0, 18], sizes = [4, 256], strides = [1, 1]} : vector<4x290xf32> to vector<4x256xf32>
    %c-1_i32_33 = arith.constant -1 : i32
    %83 = vector.broadcast %c-1_i32_33 : i32 to vector<1x256xi32>
    %84 = arith.cmpi sge, %28, %83 : vector<1x256xi32>
    %c15_i32_34 = arith.constant 15 : i32
    %85 = vector.broadcast %c15_i32_34 : i32 to vector<1x256xi32>
    %86 = arith.cmpi slt, %28, %85 : vector<1x256xi32>
    %87 = arith.andi %84, %86 : vector<1x256xi1>
    %cst_35 = arith.constant 0.000000e+00 : f32
    %88 = vector.shape_cast %87 : vector<1x256xi1> to vector<1x256xi1>
    %89 = vector.broadcast %88 : vector<1x256xi1> to vector<4x256xi1>
    %90 = vector.broadcast %cst_35 : f32 to vector<4x256xf32>
    %91 = arith.select %89, %82, %90 : vector<4x256xi1>, vector<4x256xf32>
    %c5 = arith.constant 5 : index
    %c0_36 = arith.constant 0 : index
    %c0_37 = arith.constant 0 : index
    %92 = vector.load %arg4[%c5, %c0_36, %c0_37] : memref<9x16x4xf32, #tpu.memory_space<vmem>>, vector<1x16x4xf32>
    %93 = vector.shape_cast %92 : vector<1x16x4xf32> to vector<16x4xf32>
    %cst_38 = arith.constant dense<0.000000e+00> : vector<16x256xf32>
    %94 = tpu.matmul %93, %91, %cst_38 {dimension_numbers = #tpu.dot_dimension_numbers<[1], [0], [0], [1], [0, 0, 1, 1], [], []>} : vector<16x4xf32>, vector<4x256xf32>, vector<16x256xf32> -> vector<16x256xf32>
    %95 = arith.addf %81, %94 : vector<16x256xf32>
    %96 = vector.extract_strided_slice %11 {offsets = [0, 32], sizes = [4, 256], strides = [1, 1]} : vector<4x290xf32> to vector<4x256xf32>
    %c1_i32_39 = arith.constant 1 : i32
    %97 = vector.broadcast %c1_i32_39 : i32 to vector<1x256xi32>
    %98 = arith.cmpi sge, %28, %97 : vector<1x256xi32>
    %c17_i32_40 = arith.constant 17 : i32
    %99 = vector.broadcast %c17_i32_40 : i32 to vector<1x256xi32>
    %100 = arith.cmpi slt, %28, %99 : vector<1x256xi32>
    %101 = arith.andi %98, %100 : vector<1x256xi1>
    %cst_41 = arith.constant 0.000000e+00 : f32
    %102 = vector.shape_cast %101 : vector<1x256xi1> to vector<1x256xi1>
    %103 = vector.broadcast %102 : vector<1x256xi1> to vector<4x256xi1>
    %104 = vector.broadcast %cst_41 : f32 to vector<4x256xf32>
    %105 = arith.select %103, %96, %104 : vector<4x256xi1>, vector<4x256xf32>
    %c6 = arith.constant 6 : index
    %c0_42 = arith.constant 0 : index
    %c0_43 = arith.constant 0 : index
    %106 = vector.load %arg4[%c6, %c0_42, %c0_43] : memref<9x16x4xf32, #tpu.memory_space<vmem>>, vector<1x16x4xf32>
    %107 = vector.shape_cast %106 : vector<1x16x4xf32> to vector<16x4xf32>
    %cst_44 = arith.constant dense<0.000000e+00> : vector<16x256xf32>
    %108 = tpu.matmul %107, %105, %cst_44 {dimension_numbers = #tpu.dot_dimension_numbers<[1], [0], [0], [1], [0, 0, 1, 1], [], []>} : vector<16x4xf32>, vector<4x256xf32>, vector<16x256xf32> -> vector<16x256xf32>
    %109 = arith.addf %95, %108 : vector<16x256xf32>
    %110 = vector.extract_strided_slice %11 {offsets = [0, 33], sizes = [4, 256], strides = [1, 1]} : vector<4x290xf32> to vector<4x256xf32>
    %c7 = arith.constant 7 : index
    %c0_45 = arith.constant 0 : index
    %c0_46 = arith.constant 0 : index
    %111 = vector.load %arg4[%c7, %c0_45, %c0_46] : memref<9x16x4xf32, #tpu.memory_space<vmem>>, vector<1x16x4xf32>
    %112 = vector.shape_cast %111 : vector<1x16x4xf32> to vector<16x4xf32>
    %cst_47 = arith.constant dense<0.000000e+00> : vector<16x256xf32>
    %113 = tpu.matmul %112, %110, %cst_47 {dimension_numbers = #tpu.dot_dimension_numbers<[1], [0], [0], [1], [0, 0, 1, 1], [], []>} : vector<16x4xf32>, vector<4x256xf32>, vector<16x256xf32> -> vector<16x256xf32>
    %114 = arith.addf %109, %113 : vector<16x256xf32>
    %115 = vector.extract_strided_slice %11 {offsets = [0, 34], sizes = [4, 256], strides = [1, 1]} : vector<4x290xf32> to vector<4x256xf32>
    %c-1_i32_48 = arith.constant -1 : i32
    %116 = vector.broadcast %c-1_i32_48 : i32 to vector<1x256xi32>
    %117 = arith.cmpi sge, %28, %116 : vector<1x256xi32>
    %c15_i32_49 = arith.constant 15 : i32
    %118 = vector.broadcast %c15_i32_49 : i32 to vector<1x256xi32>
    %119 = arith.cmpi slt, %28, %118 : vector<1x256xi32>
    %120 = arith.andi %117, %119 : vector<1x256xi1>
    %cst_50 = arith.constant 0.000000e+00 : f32
    %121 = vector.shape_cast %120 : vector<1x256xi1> to vector<1x256xi1>
    %122 = vector.broadcast %121 : vector<1x256xi1> to vector<4x256xi1>
    %123 = vector.broadcast %cst_50 : f32 to vector<4x256xf32>
    %124 = arith.select %122, %115, %123 : vector<4x256xi1>, vector<4x256xf32>
    %c8 = arith.constant 8 : index
    %c0_51 = arith.constant 0 : index
    %c0_52 = arith.constant 0 : index
    %125 = vector.load %arg4[%c8, %c0_51, %c0_52] : memref<9x16x4xf32, #tpu.memory_space<vmem>>, vector<1x16x4xf32>
    %126 = vector.shape_cast %125 : vector<1x16x4xf32> to vector<16x4xf32>
    %cst_53 = arith.constant dense<0.000000e+00> : vector<16x256xf32>
    %127 = tpu.matmul %126, %124, %cst_53 {dimension_numbers = #tpu.dot_dimension_numbers<[1], [0], [0], [1], [0, 0, 1, 1], [], []>} : vector<16x4xf32>, vector<4x256xf32>, vector<16x256xf32> -> vector<16x256xf32>
    %128 = arith.addf %114, %127 : vector<16x256xf32>
    %c0_54 = arith.constant 0 : index
    %c0_55 = arith.constant 0 : index
    %129 = vector.load %arg5[%c0_54, %c0_55] : memref<16x1xf32, #tpu.memory_space<vmem>>, vector<16x1xf32>
    %130 = vector.broadcast %129 : vector<16x1xf32> to vector<16x256xf32>
    %131 = arith.addf %128, %130 : vector<16x256xf32>
    %132 = vector.extract_strided_slice %131 {offsets = [0, 0], sizes = [8, 256], strides = [1, 1]} : vector<16x256xf32> to vector<8x256xf32>
    %133 = vector.extract_strided_slice %131 {offsets = [8, 0], sizes = [8, 256], strides = [1, 1]} : vector<16x256xf32> to vector<8x256xf32>
    %134 = arith.maximumf %132, %133 : vector<8x256xf32>
    %c0_56 = arith.constant 0 : index
    %c0_57 = arith.constant 0 : index
    %c0_58 = arith.constant 0 : index
    %135 = vector.load %arg6[%c0_56, %c0_57, %c0_58] : memref<1x8x256xf32, #tpu.memory_space<vmem>>, vector<1x8x256xf32>
    %136 = vector.shape_cast %135 : vector<1x8x256xf32> to vector<8x256xf32>
    %137 = vector.shape_cast %134 : vector<8x256xf32> to vector<1x8x256xf32>
    tpu.vector_store %arg6[%c0_56, %c0_57, %c0_58], %137 {strides = array<i32>} : memref<1x8x256xf32, #tpu.memory_space<vmem>>, vector<1x8x256xf32>,
    return
  }
  func.func @transform_0(%arg0: i32) -> (i32, i32, i32) {
    %c0_i32 = arith.constant 0 : i32
    %c0_i32_0 = arith.constant 0 : i32
    %c0_i32_1 = arith.constant 0 : i32
    return %arg0, %c0_i32, %c0_i32_0 : i32, i32, i32
  }
  func.func @transform_1(%arg0: i32) -> (i32, i32) {
    %c0_i32 = arith.constant 0 : i32
    %c0_i32_0 = arith.constant 0 : i32
    %c0_i32_1 = arith.constant 0 : i32
    return %c0_i32, %c0_i32_0 : i32, i32
  }
  func.func @transform_2(%arg0: i32) -> (i32, i32) {
    %c0_i32 = arith.constant 0 : i32
    %c0_i32_0 = arith.constant 0 : i32
    %c0_i32_1 = arith.constant 0 : i32
    return %c0_i32, %c0_i32_0 : i32, i32
  }
  func.func @transform_3(%arg0: i32) -> (i32, i32, i32) {
    %c0_i32 = arith.constant 0 : i32
    %c0_i32_0 = arith.constant 0 : i32
    %c0_i32_1 = arith.constant 0 : i32
    %c0_i32_2 = arith.constant 0 : i32
    return %c0_i32, %c0_i32_0, %c0_i32_1 : i32, i32, i32
  }
  func.func @transform_4(%arg0: i32) -> (i32, i32) {
    %c0_i32 = arith.constant 0 : i32
    %c0_i32_0 = arith.constant 0 : i32
    %c0_i32_1 = arith.constant 0 : i32
    return %c0_i32, %c0_i32_0 : i32, i32
  }
  func.func @transform_5(%arg0: i32) -> (i32, i32, i32) {
    %c0_i32 = arith.constant 0 : i32
    %c0_i32_0 = arith.constant 0 : i32
    %c0_i32_1 = arith.constant 0 : i32
    return %arg0, %c0_i32, %c0_i32_0 : i32, i32, i32
  }
}

</mosaic_0001>

<llo_original>
// kernel: tpu_custom_call.1
$region0: #{tpu_custom_call.1}
  #allocation0 [shape = 'u32[]', space=smem, size = 0x4, offset = 0x4, fixed_abs, tag = 'smem constant byte address 0x4 - core index']
  #allocation1 [shape = 'u32[144,128]{1,0:T(1,128)}', space=vmem, size = 0x12000, scoped, tag = 'internal scratch']
  %s0 = inlined_call_operand.vmem [shape: f32[2,4,256], index: 0, kind: input, shape index: {}]
  %s1 = inlined_call_operand.vmem [shape: f32[8,4], index: 1, kind: input, shape index: {}]
  %s2 = inlined_call_operand.vmem [shape: f32[8,1], index: 2, kind: input, shape index: {}]
  %s3 = inlined_call_operand.vmem [shape: f32[9,16,4], index: 3, kind: input, shape index: {}]
  %s4 = inlined_call_operand.vmem [shape: f32[16,1], index: 4, kind: input, shape index: {}]
  %s5 = inlined_call_operand.hbm [shape: f32[2,8,256], index: 5, kind: output, shape index: {}]
  %s6 = sld [smem:[#allocation0]]
  $region53: #{tpu_custom_call.1} parent=0
    _
  %s8 = ssub.s32 1, %s6
  %s9 = scalar_select 0, %s8, %s6
  $region1: #{tpu_custom_call.1} parent=0
    #allocation2 [shape = 'u8[16384]{0}', space=vmem, size = 0x4000, scoped, tag = 'output window, operand 0']
    #allocation3 [shape = 's32[2]{0}', space=sflag, size = 0x8, scoped, tag = 'scoped memory for tpu_custom_call.1']
    %10 = vsyncpa [#allocation3], 0
    %s11 = scalar_lea.sflag [#allocation3], 1
    %12 = vsyncpa %s11, 0
    loop: start=0, step=1, limit=4
    $region2: #{tpu_custom_call.1} parent=1 // loop_pre_header
      _
    $region3: #{tpu_custom_call.1} parent=1 // loop_header
      %s14 = sphi 0, %s18
      %p15 = scmp.ge.s32.totalorder %s14, 4
      %s24 = sphi 0, %s26
      %s27 = sphi 0, %s24
      %s28 = sphi 0, %s27
      %s44 = sphi 0, %s28
      %s48 = sphi 0, %s48
      %s50 = sphi 0, %s48
      %s51 = sphi 0, %s50
      %s65 = sphi 0, %s51
      %s69 = sphi 0, %s69
      %s71 = sphi 0, %s69
      %s72 = sphi 0, %s71
      %s86 = sphi 0, %s72
      %s90 = sphi 0, %s90
      %s92 = sphi 0, %s90
      %s93 = sphi 0, %s92
      %s107 = sphi 0, %s93
      %s111 = sphi 0, %s111
      %s113 = sphi 0, %s111
      %s114 = sphi 0, %s113
      %s128 = sphi 0, %s114
      %s134 = sphi 0, %s136
      %s137 = sphi 0, %s134
      %s138 = sphi 0, %s137
      %s154 = sphi 0, %s138
    $region4: #{tpu_custom_call.1} parent=1 // loop_header_branch
      %17 = sbr.rel (%p15) target = $region8
    $region5: #{tpu_custom_call.1} parent=1 // loop_body
      %s19 = ssub.s32 %s14, 1
      %s20 = ssub.s32 %s14, 2
      %s21 = sadd.s32 %s14, 1
      %s22 = ssub.s32 %s14, %s21
      %p23 = scmp.eq.s32.totalorder %s22, 0
      %s25 = sadd.s32 %s24, 1
      %s26 = scalar_select %p23, %s24, %s25
      %p29 = pneg %p23
      %p30 = scmp.eq.s32.totalorder %s14, 1
      %p31 = por %p29, %p30
      %p32 = scmp.ne.s32.totalorder %s24, %s27
      %p33 = scmp.eq.s32.totalorder %s14, 0
      %p34 = por %p32, %p33
      %p35 = scmp.ne.s32.totalorder %s24, %s27
      %p36 = scmp.eq.s32.totalorder %s19, 1
      %p37 = por %p35, %p36
      %p38 = scmp.ne.s32.totalorder %s27, %s28
      %p39 = scmp.eq.s32.totalorder %s19, 0
      %p40 = por %p38, %p39
      %p41 = scmp.ne.s32.totalorder %s27, %s28
      %p42 = scmp.eq.s32.totalorder %s20, 1
      %p43 = por %p41, %p42
      %p45 = scmp.ne.s32.totalorder %s28, %s44
      %p46 = scmp.eq.s32.totalorder %s20, 0
      %p47 = por %p45, %p46
      %s49 = sadd.s32 %s48, 1
      %p52 = scmp.eq.s32.totalorder %s14, 1
      %p53 = scmp.ne.s32.totalorder %s48, %s50
      %p54 = scmp.eq.s32.totalorder %s14, 0
      %p55 = por %p53, %p54
      %p56 = scmp.ne.s32.totalorder %s48, %s50
      %p57 = scmp.eq.s32.totalorder %s19, 1
      %p58 = por %p56, %p57
      %p59 = scmp.ne.s32.totalorder %s50, %s51
      %p60 = scmp.eq.s32.totalorder %s19, 0
      %p61 = por %p59, %p60
      %p62 = scmp.ne.s32.totalorder %s50, %s51
      %p63 = scmp.eq.s32.totalorder %s20, 1
      %p64 = por %p62, %p63
      %p66 = scmp.ne.s32.totalorder %s51, %s65
      %p67 = scmp.eq.s32.totalorder %s20, 0
      %p68 = por %p66, %p67
      %s70 = sadd.s32 %s69, 1
      %p73 = scmp.eq.s32.totalorder %s14, 1
      %p74 = scmp.ne.s32.totalorder %s69, %s71
      %p75 = scmp.eq.s32.totalorder %s14, 0
      %p76 = por %p74, %p75
      %p77 = scmp.ne.s32.totalorder %s69, %s71
      %p78 = scmp.eq.s32.totalorder %s19, 1
      %p79 = por %p77, %p78
      %p80 = scmp.ne.s32.totalorder %s71, %s72
      %p81 = scmp.eq.s32.totalorder %s19, 0
      %p82 = por %p80, %p81
      %p83 = scmp.ne.s32.totalorder %s71, %s72
      %p84 = scmp.eq.s32.totalorder %s20, 1
      %p85 = por %p83, %p84
      %p87 = scmp.ne.s32.totalorder %s72, %s86
      %p88 = scmp.eq.s32.totalorder %s20, 0
      %p89 = por %p87, %p88
      %s91 = sadd.s32 %s90, 1
      %p94 = scmp.eq.s32.totalorder %s14, 1
      %p95 = scmp.ne.s32.totalorder %s90, %s92
      %p96 = scmp.eq.s32.totalorder %s14, 0
      %p97 = por %p95, %p96
      %p98 = scmp.ne.s32.totalorder %s90, %s92
      %p99 = scmp.eq.s32.totalorder %s19, 1
      %p100 = por %p98, %p99
      %p101 = scmp.ne.s32.totalorder %s92, %s93
      %p102 = scmp.eq.s32.totalorder %s19, 0
      %p103 = por %p101, %p102
      %p104 = scmp.ne.s32.totalorder %s92, %s93
      %p105 = scmp.eq.s32.totalorder %s20, 1
      %p106 = por %p104, %p105
      %p108 = scmp.ne.s32.totalorder %s93, %s107
      %p109 = scmp.eq.s32.totalorder %s20, 0
      %p110 = por %p108, %p109
      %s112 = sadd.s32 %s111, 1
      %p115 = scmp.eq.s32.totalorder %s14, 1
      %p116 = scmp.ne.s32.totalorder %s111, %s113
      %p117 = scmp.eq.s32.totalorder %s14, 0
      %p118 = por %p116, %p117
      %p119 = scmp.ne.s32.totalorder %s111, %s113
      %p120 = scmp.eq.s32.totalorder %s19, 1
      %p121 = por %p119, %p120
      %p122 = scmp.ne.s32.totalorder %s113, %s114
      %p123 = scmp.eq.s32.totalorder %s19, 0
      %p124 = por %p122, %p123
      %p125 = scmp.ne.s32.totalorder %s113, %s114
      %p126 = scmp.eq.s32.totalorder %s20, 1
      %p127 = por %p125, %p126
      %p129 = scmp.ne.s32.totalorder %s114, %s128
      %p130 = scmp.eq.s32.totalorder %s20, 0
      %p131 = por %p129, %p130
      %s132 = ssub.s32 %s14, %s21
      %p133 = scmp.eq.s32.totalorder %s132, 0
      %s135 = sadd.s32 %s134, 1
      %s136 = scalar_select %p133, %s134, %s135
      %p139 = pneg %p133
      %p140 = scmp.eq.s32.totalorder %s14, 1
      %p141 = por %p139, %p140
      %p142 = scmp.ne.s32.totalorder %s134, %s137
      %p143 = scmp.eq.s32.totalorder %s14, 0
      %p144 = por %p142, %p143
      %p145 = scmp.ne.s32.totalorder %s134, %s137
      %p146 = scmp.eq.s32.totalorder %s19, 1
      %p147 = por %p145, %p146
      %p148 = scmp.ne.s32.totalorder %s137, %s138
      %p149 = scmp.eq.s32.totalorder %s19, 0
      %p150 = por %p148, %p149
      %p151 = scmp.ne.s32.totalorder %s137, %s138
      %p152 = scmp.eq.s32.totalorder %s20, 1
      %p153 = por %p151, %p152
      %p155 = scmp.ne.s32.totalorder %s138, %s154
      %p156 = scmp.eq.s32.totalorder %s20, 0
      %p157 = por %p155, %p156
      %p158 = scmp.le.s32.totalorder 1, %s14
      %p159 = scmp.lt.s32.totalorder %s14, 3
      %p160 = pnand %p158, %p159
      %p161 = pneg %p160
      // Predicated region
      $region9: #{tpu_custom_call.1} parent=5 // pred_check
        _
      $region10: #{tpu_custom_call.1} parent=5 // pred_check_branch
        %163 = sbr.rel (%p160) target = $region12
      $region11: #{tpu_custom_call.1} parent=5 // pred_region
        %s164 = ssub.s32 %s14, 1
        // Predicated region
        $region13: #{tpu_custom_call.1} parent=11 // pred_check
          %p165 = pneg %p61
        $region14: #{tpu_custom_call.1} parent=11 // pred_check_branch
          %167 = sbr.rel (%p165) target = $region16
        $region15: #{tpu_custom_call.1} parent=11 // pred_region
          _
        $region16: #{tpu_custom_call.1} parent=11 // pred_fallthru
          _
        // Predicated region
        $region17: #{tpu_custom_call.1} parent=11 // pred_check
          %p168 = pneg %p82
        $region18: #{tpu_custom_call.1} parent=11 // pred_check_branch
          %170 = sbr.rel (%p168) target = $region20
        $region19: #{tpu_custom_call.1} parent=11 // pred_region
          _
        $region20: #{tpu_custom_call.1} parent=11 // pred_fallthru
          _
        // Predicated region
        $region21: #{tpu_custom_call.1} parent=11 // pred_check
          %p171 = pneg %p103
        $region22: #{tpu_custom_call.1} parent=11 // pred_check_branch
          %173 = sbr.rel (%p171) target = $region24
        $region23: #{tpu_custom_call.1} parent=11 // pred_region
          _
        $region24: #{tpu_custom_call.1} parent=11 // pred_fallthru
          _
        // Predicated region
        $region25: #{tpu_custom_call.1} parent=11 // pred_check
          %p174 = pneg %p124
        $region26: #{tpu_custom_call.1} parent=11 // pred_check_branch
          %176 = sbr.rel (%p174) target = $region28
        $region27: #{tpu_custom_call.1} parent=11 // pred_region
          _
        $region28: #{tpu_custom_call.1} parent=11 // pred_fallthru
          _
      $region12: #{tpu_custom_call.1} parent=5 // pred_fallthru
        _
      %p177 = scmp.lt.s32.totalorder %s14, 2
      // Predicated region
      $region29: #{tpu_custom_call.1} parent=5 // pred_check
        %p178 = pneg %p177
      $region30: #{tpu_custom_call.1} parent=5 // pred_check_branch
        %180 = sbr.rel (%p178) target = $region32
      $region31: #{tpu_custom_call.1} parent=5 // pred_region
        // Predicated region
        $region33: #{tpu_custom_call.1} parent=31 // pred_check
          %p181 = pneg %p34
        $region34: #{tpu_custom_call.1} parent=31 // pred_check_branch
          %183 = sbr.rel (%p181) target = $region36
        $region35: #{tpu_custom_call.1} parent=31 // pred_region
          %p184 = scmp.lt.s32.totalorder %s14, 1
          %s185 = scalar_select %p184, %s14, 1
          %s186 = smul.addr %s185, 2
          %s187 = smul.addr %s186, 4
          %s188 = scalar_lea.vmem %s0, %s187
        $region36: #{tpu_custom_call.1} parent=31 // pred_fallthru
          _
      $region32: #{tpu_custom_call.1} parent=5 // pred_fallthru
        _
      %p189 = scmp.le.s32.totalorder 1, %s14
      %p190 = scmp.lt.s32.totalorder %s14, 3
      %p191 = pnand %p189, %p190
      %p192 = pneg %p191
      // Predicated region
      $region37: #{tpu_custom_call.1} parent=5 // pred_check
        _
      $region38: #{tpu_custom_call.1} parent=5 // pred_check_branch
        %194 = sbr.rel (%p191) target = $region40
      $region39: #{tpu_custom_call.1} parent=5 // pred_region
        %s195 = ssub.s32 %s14, 1
        %p196 = scmp.lt.s32.totalorder %s19, 1
        %s197 = scalar_select %p196, %s19, 1
        %s198 = smul.addr %s197, 2
        %s199 = smul.addr %s198, 4
        %s200 = scalar_lea.vmem %s0, %s199
        %p201 = pneg %p40
        %p202 = pneg %p37
        %p203 = pneg %p61
        %p204 = pneg %p58
        %p205 = pneg %p82
        %p206 = pneg %p79
        %p207 = pneg %p103
        %p208 = pneg %p100
        %p209 = pneg %p124
        %p210 = pneg %p121
        %p211 = pneg %p150
        %p212 = pneg %p147
        %s213 = sand.u32 %s137, 1
        %s214 = scalar_lea.sflag [#allocation3], %s213
        %s215 = sand.u32 %s137, 1
        %s216 = smul.addr %s215, 16
        %s217 = scalar_lea.vmem [#allocation2], %s216
        %p218 = scmp.lt.s32.totalorder %s19, 1
        %s219 = scalar_select %p218, %s19, 1
        %s220 = smul.addr %s219, 2
        %s221 = smul.addr %s220, 4
        %s222 = scalar_lea.vmem %s0, %s221
        %v223 = vld [vmem:[%s222] sm:$0xff]
        %v224 = vld [vmem:[%s1] sm:$0xff]
        %v225 = vld [vmem:[%s2] sm:$0xff]
        %227 = vset.pattern.permute.xlu0 0
        %228 = vperm.xlu0 %227, %v225
        %v229 = vpop.permute.xlu0 %228
        %v232 = vcombine.high %v223, %v223
        %vm233 = vcmask 31744
        %v235 = vsel %vm233, %v224, 0
        %vm237 = vcmask 1043456
        %v238 = vsel %vm237, %v223, 0
        %v240 = vsel %vm237, %v232, 0
        %242 = vmatprep.subr.mxu0 %v240
        %243 = vmatpush1.msra.mxu0 %v238
        %244 = vmatprep.subr.mxu0 0.0
        %245 = vmatpush1.msra.mxu0 0.0
        %246 = vmatprep.subr.mxu0 0.0
        %247 = vmatpush1.msra.mxu0 0.0
        %248 = vmatprep.subr.mxu0 0.0
        %249 = vmatpush1.msra.mxu0 0.0
        %250 = vmatprep.subr.mxu0 0.0
        %251 = vmatpush1.msra.mxu0 0.0
        %252 = vmatprep.subr.mxu0 0.0
        %253 = vmatpush1.msra.mxu0 0.0
        %254 = vmatprep.subr.mxu0 0.0
        %255 = vmatpush1.msra.mxu0 0.0
        %256 = vmatprep.subr.mxu0 0.0
        %257 = vmatpush1.msra.mxu0 0.0
        %258 = vmatprep.subr.mxu0 0.0
        %259 = vmatpush1.msra.mxu0 0.0
        %260 = vmatprep.subr.mxu0 0.0
        %261 = vmatpush1.msra.mxu0 0.0
        %262 = vmatprep.subr.mxu0 0.0
        %263 = vmatpush1.msra.mxu0 0.0
        %264 = vmatprep.subr.mxu0 0.0
        %265 = vmatpush1.msra.mxu0 0.0
        %266 = vmatprep.subr.mxu0 0.0
        %267 = vmatpush1.msra.mxu0 0.0
        %268 = vmatprep.subr.mxu0 0.0
        %269 = vmatpush1.msra.mxu0 0.0
        %270 = vmatprep.subr.mxu0 0.0
        %271 = vmatpush1.msra.mxu0 0.0
        %272 = vmatprep.subr.mxu0 0.0
        %273 = vmatpush1.msra.mxu0 0.0
        %274 = vmatprep.subr.mxu0 0.0
        %275 = vmatpush1.msra.mxu0 0.0
        %276 = vmatprep.subr.mxu0 0.0
        %277 = vmatpush1.msra.mxu0 0.0
        %278 = vmatprep.subr.mxu0 0.0
        %279 = vmatpush1.msra.mxu0 0.0
        %280 = vmatprep.subr.mxu0 0.0
        %281 = vmatpush1.msra.mxu0 0.0
        %282 = vmatprep.subr.mxu0 0.0
        %283 = vmatpush1.msra.mxu0 0.0
        %284 = vmatprep.subr.mxu0 0.0
        %285 = vmatpush1.msra.mxu0 0.0
        %286 = vmatprep.subr.mxu0 0.0
        %287 = vmatpush1.msra.mxu0 0.0
        %288 = vmatprep.subr.mxu0 0.0
        %289 = vmatpush1.msra.mxu0 0.0
        %290 = vmatprep.subr.mxu0 0.0
        %291 = vmatpush1.msra.mxu0 0.0
        %292 = vmatprep.subr.mxu0 0.0
        %293 = vmatpush1.msra.mxu0 0.0
        %294 = vmatprep.subr.mxu0 0.0
        %295 = vmatpush1.msra.mxu0 0.0
        %296 = vmatprep.subr.mxu0 0.0
        %297 = vmatpush1.msra.mxu0 0.0
        %298 = vmatprep.subr.mxu0 0.0
        %299 = vmatpush1.msra.mxu0 0.0
        %300 = vmatprep.subr.mxu0 0.0
        %301 = vmatpush1.msra.mxu0 0.0
        %302 = vmatprep.subr.mxu0 0.0
        %303 = vmatpush1.msra.mxu0 0.0
        %304 = vmatprep.subr.mxu0 0.0
        %305 = vmatpush1.msra.mxu0 0.0
        %306 = vmatprep.mubr.f32.mxu0 0.0
        %307 = vmatmul.mubr.f32.gmra.mrb[0].mxu0 %v235
        %v308 = vpop.f32.mrb[0].mxu0
        %v309 = vadd.f32 %v229, %v308
        %v310 = vpop.f32.mrb[0].mxu0
        %v311 = vadd.f32 %v229, %v310
        %312 = vdwg.mxu0
        %v315 = vrot.slane %v309, 4
        %v316 = vrot.slane %v311, 4
        %v319 = vmax.f32 %v309, %v315
        %v320 = vmax.f32 %v311, %v316
        %323 = vrot.lane.b32.xlu0 %v319, 17
        %v324 = vpop.permute.xlu0 %323
        %325 = vrot.lane.b32.xlu0 %v320, 17
        %v326 = vpop.permute.xlu0 %325
        %vm327 = vcmask 138240
        %v328 = vsel %vm327, %v324, %v326
        %v332 = vsel %vm327, 0.0, %v324
        %v333 = vsel %vm327, %v326, 0.0
        %v334 = vlaneseq
        %v335 = vand.u32 %v334, 127
        %v336 = vadd.s32 %v335, 128
        %vm337 = vcmp.lt.s32.totalorder %v335, 0
        %v338 = vsub.s32 0, %v335
        %v339 = vsel %vm337, %v338, %v335
        %v340 = vshrl.u32 %v339, 4
        %v341 = vand.u32 %v339, 15
        %v342 = vsub.s32 0, %v341
        %v343 = vsel %vm337, %v342, %v341
        %vm344 = vcmp.lt.s32.totalorder %v336, 0
        %v345 = vsub.s32 0, %v336
        %v346 = vsel %vm344, %v345, %v336
        %v347 = vshrl.u32 %v346, 4
        %v348 = vand.u32 %v346, 15
        %v349 = vsub.s32 0, %v348
        %v350 = vsel %vm344, %v349, %v348
        %vm351 = vcmp.ne.s32.totalorder %v343, 0
        %vm352 = vcmp.ne.s32.totalorder %v350, 0
        %vm353 = vcmp.lt.s32.totalorder %v343, 0
        %vm354 = vcmp.lt.s32.totalorder %v350, 0
        %vm355 = vmand %vm353, %vm351
        %vm356 = vmand %vm354, %vm352
        %v357 = vadd.s32 %v343, 16
        %v358 = vadd.s32 %v350, 16
        %v359 = vsel %vm355, %v357, %v343
        %v360 = vsel %vm356, %v358, %v350
        %vm361 = vcmp.ge.s32.totalorder %v359, 1
        %vm362 = vcmp.ge.s32.totalorder %v360, 1
        %vm363 = vcmp.lt.s32.totalorder %v359, 17
        %vm364 = vcmp.lt.s32.totalorder %v360, 17
        %vm365 = vmand %vm361, %vm363
        %vm366 = vmand %vm362, %vm364
        %v367 = vsel %vm365, 1, 0
        %v368 = vsel %vm366, 1, 0
        %vm369 = vcmp.eq.s32.totalorder %v367, 1
        %vm370 = vcmp.eq.s32.totalorder %v368, 1
        %v371 = vsel %vm369, %v332, 0.0
        %v372 = vsel %vm370, %v328, 0.0
        %v373 = vld [vmem:[%s3] sm:$0xff]
        %v374 = vld [vmem:[%s3 + $0x8] sm:$0xff]
        %s375 = scalar_lea.vmem %s3, 16
        %v376 = vld [vmem:[%s375] sm:$0xff]
        %v377 = vld [vmem:[%s375 + $0x8] sm:$0xff]
        %380 = vrot.lane.b32.xlu0 %v332, 127
        %v381 = vpop.permute.xlu0 %380
        %382 = vrot.lane.b32.xlu0 %v328, 127
        %v383 = vpop.permute.xlu0 %382
        %384 = vrot.lane.b32.xlu0 %v333, 127
        %v385 = vpop.permute.xlu0 %384
        %vm386 = vcmask 1039360
        %v387 = vsel %vm386, %v381, %v383
        %v388 = vsel %vm386, %v383, %v385
        %v390 = vsel %vm233, %v376, 0
        %v393 = vsel %vm233, %v377, 0
        %v395 = vsel %vm237, %v387, 0
        %v397 = vsel %vm237, %v388, 0
        %399 = vmatprep.subr.mxu0 %v397
        %400 = vmatpush1.msra.mxu0 %v395
        %401 = vmatprep.subr.mxu0 0.0
        %402 = vmatpush1.msra.mxu0 0.0
        %403 = vmatprep.subr.mxu0 0.0
        %404 = vmatpush1.msra.mxu0 0.0
        %405 = vmatprep.subr.mxu0 0.0
        %406 = vmatpush1.msra.mxu0 0.0
        %407 = vmatprep.subr.mxu0 0.0
        %408 = vmatpush1.msra.mxu0 0.0
        %409 = vmatprep.subr.mxu0 0.0
        %410 = vmatpush1.msra.mxu0 0.0
        %411 = vmatprep.subr.mxu0 0.0
        %412 = vmatpush1.msra.mxu0 0.0
        %413 = vmatprep.subr.mxu0 0.0
        %414 = vmatpush1.msra.mxu0 0.0
        %415 = vmatprep.subr.mxu0 0.0
        %416 = vmatpush1.msra.mxu0 0.0
        %417 = vmatprep.subr.mxu0 0.0
        %418 = vmatpush1.msra.mxu0 0.0
        %419 = vmatprep.subr.mxu0 0.0
        %420 = vmatpush1.msra.mxu0 0.0
        %421 = vmatprep.subr.mxu0 0.0
        %422 = vmatpush1.msra.mxu0 0.0
        %423 = vmatprep.subr.mxu0 0.0
        %424 = vmatpush1.msra.mxu0 0.0
        %425 = vmatprep.subr.mxu0 0.0
        %426 = vmatpush1.msra.mxu0 0.0
        %427 = vmatprep.subr.mxu0 0.0
        %428 = vmatpush1.msra.mxu0 0.0
        %429 = vmatprep.subr.mxu0 0.0
        %430 = vmatpush1.msra.mxu0 0.0
        %431 = vmatprep.subr.mxu0 0.0
        %432 = vmatpush1.msra.mxu0 0.0
        %433 = vmatprep.subr.mxu0 0.0
        %434 = vmatpush1.msra.mxu0 0.0
        %435 = vmatprep.subr.mxu0 0.0
        %436 = vmatpush1.msra.mxu0 0.0
        %437 = vmatprep.subr.mxu0 0.0
        %438 = vmatpush1.msra.mxu0 0.0
        %439 = vmatprep.subr.mxu0 0.0
        %440 = vmatpush1.msra.mxu0 0.0
        %441 = vmatprep.subr.mxu0 0.0
        %442 = vmatpush1.msra.mxu0 0.0
        %443 = vmatprep.subr.mxu0 0.0
        %444 = vmatpush1.msra.mxu0 0.0
        %445 = vmatprep.subr.mxu0 0.0
        %446 = vmatpush1.msra.mxu0 0.0
        %447 = vmatprep.subr.mxu0 0.0
        %448 = vmatpush1.msra.mxu0 0.0
        %449 = vmatprep.subr.mxu0 0.0
        %450 = vmatpush1.msra.mxu0 0.0
        %451 = vmatprep.subr.mxu0 0.0
        %452 = vmatpush1.msra.mxu0 0.0
        %453 = vmatprep.subr.mxu0 0.0
        %454 = vmatpush1.msra.mxu0 0.0
        %455 = vmatprep.subr.mxu0 0.0
        %456 = vmatpush1.msra.mxu0 0.0
        %457 = vmatprep.subr.mxu0 0.0
        %458 = vmatpush1.msra.mxu0 0.0
        %459 = vmatprep.subr.mxu0 0.0
        %460 = vmatpush1.msra.mxu0 0.0
        %461 = vmatprep.subr.mxu0 0.0
        %462 = vmatpush1.msra.mxu0 0.0
        %463 = vmatprep.mubr.f32.mxu0 0.0
        %464 = vmatmul.mubr.f32.gmra.mrb[0].mxu0 %v390
        %v465 = vpop.f32.mrb[0].mxu0
        %v466 = vadd.f32 0.0, %v465
        %v467 = vpop.f32.mrb[0].mxu0
        %v468 = vadd.f32 0.0, %v467
        %469 = vmatprep.mubr.f32.mxu0 0.0
        %470 = vmatmul.mubr.f32.gmra.mrb[0].mxu0 %v393
        %v471 = vpop.f32.mrb[0].mxu0
        %v472 = vadd.f32 0.0, %v471
        %v473 = vpop.f32.mrb[0].mxu0
        %v474 = vadd.f32 0.0, %v473
        %475 = vdwg.mxu0
        %v477 = vsel %vm233, %v373, 0
        %v480 = vsel %vm233, %v374, 0
        %v483 = vsel %vm237, %v371, 0
        %v486 = vsel %vm237, %v372, 0
        %488 = vmatprep.subr.mxu0 %v486
        %489 = vmatpush1.msra.mxu0 %v483
        %490 = vmatprep.subr.mxu0 0.0
        %491 = vmatpush1.msra.mxu0 0.0
        %492 = vmatprep.subr.mxu0 0.0
        %493 = vmatpush1.msra.mxu0 0.0
        %494 = vmatprep.subr.mxu0 0.0
        %495 = vmatpush1.msra.mxu0 0.0
        %496 = vmatprep.subr.mxu0 0.0
        %497 = vmatpush1.msra.mxu0 0.0
        %498 = vmatprep.subr.mxu0 0.0
        %499 = vmatpush1.msra.mxu0 0.0
        %500 = vmatprep.subr.mxu0 0.0
        %501 = vmatpush1.msra.mxu0 0.0
        %502 = vmatprep.subr.mxu0 0.0
        %503 = vmatpush1.msra.mxu0 0.0
        %504 = vmatprep.subr.mxu0 0.0
        %505 = vmatpush1.msra.mxu0 0.0
        %506 = vmatprep.subr.mxu0 0.0
        %507 = vmatpush1.msra.mxu0 0.0
        %508 = vmatprep.subr.mxu0 0.0
        %509 = vmatpush1.msra.mxu0 0.0
        %510 = vmatprep.subr.mxu0 0.0
        %511 = vmatpush1.msra.mxu0 0.0
        %512 = vmatprep.subr.mxu0 0.0
        %513 = vmatpush1.msra.mxu0 0.0
        %514 = vmatprep.subr.mxu0 0.0
        %515 = vmatpush1.msra.mxu0 0.0
        %516 = vmatprep.subr.mxu0 0.0
        %517 = vmatpush1.msra.mxu0 0.0
        %518 = vmatprep.subr.mxu0 0.0
        %519 = vmatpush1.msra.mxu0 0.0
        %520 = vmatprep.subr.mxu0 0.0
        %521 = vmatpush1.msra.mxu0 0.0
        %522 = vmatprep.subr.mxu0 0.0
        %523 = vmatpush1.msra.mxu0 0.0
        %524 = vmatprep.subr.mxu0 0.0
        %525 = vmatpush1.msra.mxu0 0.0
        %526 = vmatprep.subr.mxu0 0.0
        %527 = vmatpush1.msra.mxu0 0.0
        %528 = vmatprep.subr.mxu0 0.0
        %529 = vmatpush1.msra.mxu0 0.0
        %530 = vmatprep.subr.mxu0 0.0
        %531 = vmatpush1.msra.mxu0 0.0
        %532 = vmatprep.subr.mxu0 0.0
        %533 = vmatpush1.msra.mxu0 0.0
        %534 = vmatprep.subr.mxu0 0.0
        %535 = vmatpush1.msra.mxu0 0.0
        %536 = vmatprep.subr.mxu0 0.0
        %537 = vmatpush1.msra.mxu0 0.0
        %538 = vmatprep.subr.mxu0 0.0
        %539 = vmatpush1.msra.mxu0 0.0
        %540 = vmatprep.subr.mxu0 0.0
        %541 = vmatpush1.msra.mxu0 0.0
        %542 = vmatprep.subr.mxu0 0.0
        %543 = vmatpush1.msra.mxu0 0.0
        %544 = vmatprep.subr.mxu0 0.0
        %545 = vmatpush1.msra.mxu0 0.0
        %546 = vmatprep.subr.mxu0 0.0
        %547 = vmatpush1.msra.mxu0 0.0
        %548 = vmatprep.subr.mxu0 0.0
        %549 = vmatpush1.msra.mxu0 0.0
        %550 = vmatprep.subr.mxu0 0.0
        %551 = vmatpush1.msra.mxu0 0.0
        %552 = vmatprep.mubr.f32.mxu0 0.0
        %553 = vmatmul.mubr.f32.gmra.mrb[0].mxu0 %v477
        %v554 = vpop.f32.mrb[0].mxu0
        %v555 = vadd.f32 %v466, %v554
        %v556 = vpop.f32.mrb[0].mxu0
        %v557 = vadd.f32 %v468, %v556
        %558 = vmatprep.mubr.f32.mxu0 0.0
        %559 = vmatmul.mubr.f32.gmra.mrb[0].mxu0 %v480
        %v560 = vpop.f32.mrb[0].mxu0
        %v561 = vadd.f32 %v472, %v560
        %v562 = vpop.f32.mrb[0].mxu0
        %v563 = vadd.f32 %v474, %v562
        %564 = vdwg.mxu0
        %vm565 = vcmp.ge.s32.totalorder %v359, 4294967295
        %vm566 = vcmp.ge.s32.totalorder %v360, 4294967295
        %vm567 = vcmp.lt.s32.totalorder %v359, 15
        %vm568 = vcmp.lt.s32.totalorder %v360, 15
        %vm569 = vmand %vm565, %vm567
        %vm570 = vmand %vm566, %vm568
        %v571 = vsel %vm569, 1, 0
        %v572 = vsel %vm570, 1, 0
        %vm573 = vcmp.eq.s32.totalorder %v571, 1
        %vm574 = vcmp.eq.s32.totalorder %v572, 1
        %575 = vrot.lane.b32.xlu0 %v332, 126
        %v576 = vpop.permute.xlu0 %575
        %577 = vrot.lane.b32.xlu0 %v328, 126
        %v578 = vpop.permute.xlu0 %577
        %579 = vrot.lane.b32.xlu0 %v333, 126
        %v580 = vpop.permute.xlu0 %579
        %vm581 = vcmask 1031168
        %v582 = vsel %vm581, %v576, %v578
        %v583 = vsel %vm581, %v578, %v580
        %v586 = vsel %vm573, %v582, 0.0
        %v587 = vsel %vm574, %v583, 0.0
        %s588 = scalar_lea.vmem %s3, 32
        %v589 = vld [vmem:[%s588] sm:$0xff]
        %v590 = vld [vmem:[%s588 + $0x8] sm:$0xff]
        %v592 = vsel %vm233, %v589, 0
        %v595 = vsel %vm233, %v590, 0
        %v598 = vsel %vm237, %v586, 0
        %v601 = vsel %vm237, %v587, 0
        %603 = vmatprep.subr.mxu0 %v601
        %604 = vmatpush1.msra.mxu0 %v598
        %605 = vmatprep.subr.mxu0 0.0
        %606 = vmatpush1.msra.mxu0 0.0
        %607 = vmatprep.subr.mxu0 0.0
        %608 = vmatpush1.msra.mxu0 0.0
        %609 = vmatprep.subr.mxu0 0.0
        %610 = vmatpush1.msra.mxu0 0.0
        %611 = vmatprep.subr.mxu0 0.0
        %612 = vmatpush1.msra.mxu0 0.0
        %613 = vmatprep.subr.mxu0 0.0
        %614 = vmatpush1.msra.mxu0 0.0
        %615 = vmatprep.subr.mxu0 0.0
        %616 = vmatpush1.msra.mxu0 0.0
        %617 = vmatprep.subr.mxu0 0.0
        %618 = vmatpush1.msra.mxu0 0.0
        %619 = vmatprep.subr.mxu0 0.0
        %620 = vmatpush1.msra.mxu0 0.0
        %621 = vmatprep.subr.mxu0 0.0
        %622 = vmatpush1.msra.mxu0 0.0
        %623 = vmatprep.subr.mxu0 0.0
        %624 = vmatpush1.msra.mxu0 0.0
        %625 = vmatprep.subr.mxu0 0.0
        %626 = vmatpush1.msra.mxu0 0.0
        %627 = vmatprep.subr.mxu0 0.0
        %628 = vmatpush1.msra.mxu0 0.0
        %629 = vmatprep.subr.mxu0 0.0
        %630 = vmatpush1.msra.mxu0 0.0
        %631 = vmatprep.subr.mxu0 0.0
        %632 = vmatpush1.msra.mxu0 0.0
        %633 = vmatprep.subr.mxu0 0.0
        %634 = vmatpush1.msra.mxu0 0.0
        %635 = vmatprep.subr.mxu0 0.0
        %636 = vmatpush1.msra.mxu0 0.0
        %637 = vmatprep.subr.mxu0 0.0
        %638 = vmatpush1.msra.mxu0 0.0
        %639 = vmatprep.subr.mxu0 0.0
        %640 = vmatpush1.msra.mxu0 0.0
        %641 = vmatprep.subr.mxu0 0.0
        %642 = vmatpush1.msra.mxu0 0.0
        %643 = vmatprep.subr.mxu0 0.0
        %644 = vmatpush1.msra.mxu0 0.0
        %645 = vmatprep.subr.mxu0 0.0
        %646 = vmatpush1.msra.mxu0 0.0
        %647 = vmatprep.subr.mxu0 0.0
        %648 = vmatpush1.msra.mxu0 0.0
        %649 = vmatprep.subr.mxu0 0.0
        %650 = vmatpush1.msra.mxu0 0.0
        %651 = vmatprep.subr.mxu0 0.0
        %652 = vmatpush1.msra.mxu0 0.0
        %653 = vmatprep.subr.mxu0 0.0
        %654 = vmatpush1.msra.mxu0 0.0
        %655 = vmatprep.subr.mxu0 0.0
        %656 = vmatpush1.msra.mxu0 0.0
        %657 = vmatprep.subr.mxu0 0.0
        %658 = vmatpush1.msra.mxu0 0.0
        %659 = vmatprep.subr.mxu0 0.0
        %660 = vmatpush1.msra.mxu0 0.0
        %661 = vmatprep.subr.mxu0 0.0
        %662 = vmatpush1.msra.mxu0 0.0
        %663 = vmatprep.subr.mxu0 0.0
        %664 = vmatpush1.msra.mxu0 0.0
        %665 = vmatprep.subr.mxu0 0.0
        %666 = vmatpush1.msra.mxu0 0.0
        %667 = vmatprep.mubr.f32.mxu0 0.0
        %668 = vmatmul.mubr.f32.gmra.mrb[0].mxu0 %v592
        %v669 = vpop.f32.mrb[0].mxu0
        %v670 = vadd.f32 0.0, %v669
        %v671 = vpop.f32.mrb[0].mxu0
        %v672 = vadd.f32 0.0, %v671
        %673 = vmatprep.mubr.f32.mxu0 0.0
        %674 = vmatmul.mubr.f32.gmra.mrb[0].mxu0 %v595
        %v675 = vpop.f32.mrb[0].mxu0
        %v676 = vadd.f32 0.0, %v675
        %v677 = vpop.f32.mrb[0].mxu0
        %v678 = vadd.f32 0.0, %v677
        %679 = vdwg.mxu0
        %v680 = vadd.f32 %v555, %v670
        %v681 = vadd.f32 %v557, %v672
        %v682 = vadd.f32 %v561, %v676
        %v683 = vadd.f32 %v563, %v678
        %684 = vrot.lane.b32.xlu0 %v332, 112
        %v685 = vpop.permute.xlu0 %684
        %686 = vrot.lane.b32.xlu0 %v328, 112
        %v687 = vpop.permute.xlu0 %686
        %688 = vrot.lane.b32.xlu0 %v333, 112
        %v689 = vpop.permute.xlu0 %688
        %vm690 = vcmask 916480
        %v691 = vsel %vm690, %v685, %v687
        %v692 = vsel %vm690, %v687, %v689
        %v695 = vsel %vm369, %v691, 0.0
        %v696 = vsel %vm370, %v692, 0.0
        %s697 = scalar_lea.vmem %s3, 48
        %v698 = vld [vmem:[%s697] sm:$0xff]
        %v699 = vld [vmem:[%s697 + $0x8] sm:$0xff]
        %v701 = vsel %vm233, %v698, 0
        %v704 = vsel %vm233, %v699, 0
        %v707 = vsel %vm237, %v695, 0
        %v710 = vsel %vm237, %v696, 0
        %712 = vmatprep.subr.mxu0 %v710
        %713 = vmatpush1.msra.mxu0 %v707
        %714 = vmatprep.subr.mxu0 0.0
        %715 = vmatpush1.msra.mxu0 0.0
        %716 = vmatprep.subr.mxu0 0.0
        %717 = vmatpush1.msra.mxu0 0.0
        %718 = vmatprep.subr.mxu0 0.0
        %719 = vmatpush1.msra.mxu0 0.0
        %720 = vmatprep.subr.mxu0 0.0
        %721 = vmatpush1.msra.mxu0 0.0
        %722 = vmatprep.subr.mxu0 0.0
        %723 = vmatpush1.msra.mxu0 0.0
        %724 = vmatprep.subr.mxu0 0.0
        %725 = vmatpush1.msra.mxu0 0.0
        %726 = vmatprep.subr.mxu0 0.0
        %727 = vmatpush1.msra.mxu0 0.0
        %728 = vmatprep.subr.mxu0 0.0
        %729 = vmatpush1.msra.mxu0 0.0
        %730 = vmatprep.subr.mxu0 0.0
        %731 = vmatpush1.msra.mxu0 0.0
        %732 = vmatprep.subr.mxu0 0.0
        %733 = vmatpush1.msra.mxu0 0.0
        %734 = vmatprep.subr.mxu0 0.0
        %735 = vmatpush1.msra.mxu0 0.0
        %736 = vmatprep.subr.mxu0 0.0
        %737 = vmatpush1.msra.mxu0 0.0
        %738 = vmatprep.subr.mxu0 0.0
        %739 = vmatpush1.msra.mxu0 0.0
        %740 = vmatprep.subr.mxu0 0.0
        %741 = vmatpush1.msra.mxu0 0.0
        %742 = vmatprep.subr.mxu0 0.0
        %743 = vmatpush1.msra.mxu0 0.0
        %744 = vmatprep.subr.mxu0 0.0
        %745 = vmatpush1.msra.mxu0 0.0
        %746 = vmatprep.subr.mxu0 0.0
        %747 = vmatpush1.msra.mxu0 0.0
        %748 = vmatprep.subr.mxu0 0.0
        %749 = vmatpush1.msra.mxu0 0.0
        %750 = vmatprep.subr.mxu0 0.0
        %751 = vmatpush1.msra.mxu0 0.0
        %752 = vmatprep.subr.mxu0 0.0
        %753 = vmatpush1.msra.mxu0 0.0
        %754 = vmatprep.subr.mxu0 0.0
        %755 = vmatpush1.msra.mxu0 0.0
        %756 = vmatprep.subr.mxu0 0.0
        %757 = vmatpush1.msra.mxu0 0.0
        %758 = vmatprep.subr.mxu0 0.0
        %759 = vmatpush1.msra.mxu0 0.0
        %760 = vmatprep.subr.mxu0 0.0
        %761 = vmatpush1.msra.mxu0 0.0
        %762 = vmatprep.subr.mxu0 0.0
        %763 = vmatpush1.msra.mxu0 0.0
        %764 = vmatprep.subr.mxu0 0.0
        %765 = vmatpush1.msra.mxu0 0.0
        %766 = vmatprep.subr.mxu0 0.0
        %767 = vmatpush1.msra.mxu0 0.0
        %768 = vmatprep.subr.mxu0 0.0
        %769 = vmatpush1.msra.mxu0 0.0
        %770 = vmatprep.subr.mxu0 0.0
        %771 = vmatpush1.msra.mxu0 0.0
        %772 = vmatprep.subr.mxu0 0.0
        %773 = vmatpush1.msra.mxu0 0.0
        %774 = vmatprep.subr.mxu0 0.0
        %775 = vmatpush1.msra.mxu0 0.0
        %776 = vmatprep.mubr.f32.mxu0 0.0
        %777 = vmatmul.mubr.f32.gmra.mrb[0].mxu0 %v701
        %v778 = vpop.f32.mrb[0].mxu0
        %v779 = vadd.f32 0.0, %v778
        %v780 = vpop.f32.mrb[0].mxu0
        %v781 = vadd.f32 0.0, %v780
        %782 = vmatprep.mubr.f32.mxu0 0.0
        %783 = vmatmul.mubr.f32.gmra.mrb[0].mxu0 %v704
        %v784 = vpop.f32.mrb[0].mxu0
        %v785 = vadd.f32 0.0, %v784
        %v786 = vpop.f32.mrb[0].mxu0
        %v787 = vadd.f32 0.0, %v786
        %788 = vdwg.mxu0
        %v789 = vadd.f32 %v680, %v779
        %v790 = vadd.f32 %v681, %v781
        %v791 = vadd.f32 %v682, %v785
        %v792 = vadd.f32 %v683, %v787
        %s793 = scalar_lea.vmem %s3, 64
        %v794 = vld [vmem:[%s793] sm:$0xff]
        %v795 = vld [vmem:[%s793 + $0x8] sm:$0xff]
        %796 = vrot.lane.b32.xlu0 %v332, 111
        %v797 = vpop.permute.xlu0 %796
        %798 = vrot.lane.b32.xlu0 %v328, 111
        %v799 = vpop.permute.xlu0 %798
        %800 = vrot.lane.b32.xlu0 %v333, 111
        %v801 = vpop.permute.xlu0 %800
        %vm802 = vcmask 908288
        %v803 = vsel %vm802, %v797, %v799
        %v804 = vsel %vm802, %v799, %v801
        %v806 = vsel %vm233, %v794, 0
        %v809 = vsel %vm233, %v795, 0
        %v811 = vsel %vm237, %v803, 0
        %v813 = vsel %vm237, %v804, 0
        %815 = vmatprep.subr.mxu0 %v813
        %816 = vmatpush1.msra.mxu0 %v811
        %817 = vmatprep.subr.mxu0 0.0
        %818 = vmatpush1.msra.mxu0 0.0
        %819 = vmatprep.subr.mxu0 0.0
        %820 = vmatpush1.msra.mxu0 0.0
        %821 = vmatprep.subr.mxu0 0.0
        %822 = vmatpush1.msra.mxu0 0.0
        %823 = vmatprep.subr.mxu0 0.0
        %824 = vmatpush1.msra.mxu0 0.0
        %825 = vmatprep.subr.mxu0 0.0
        %826 = vmatpush1.msra.mxu0 0.0
        %827 = vmatprep.subr.mxu0 0.0
        %828 = vmatpush1.msra.mxu0 0.0
        %829 = vmatprep.subr.mxu0 0.0
        %830 = vmatpush1.msra.mxu0 0.0
        %831 = vmatprep.subr.mxu0 0.0
        %832 = vmatpush1.msra.mxu0 0.0
        %833 = vmatprep.subr.mxu0 0.0
        %834 = vmatpush1.msra.mxu0 0.0
        %835 = vmatprep.subr.mxu0 0.0
        %836 = vmatpush1.msra.mxu0 0.0
        %837 = vmatprep.subr.mxu0 0.0
        %838 = vmatpush1.msra.mxu0 0.0
        %839 = vmatprep.subr.mxu0 0.0
        %840 = vmatpush1.msra.mxu0 0.0
        %841 = vmatprep.subr.mxu0 0.0
        %842 = vmatpush1.msra.mxu0 0.0
        %843 = vmatprep.subr.mxu0 0.0
        %844 = vmatpush1.msra.mxu0 0.0
        %845 = vmatprep.subr.mxu0 0.0
        %846 = vmatpush1.msra.mxu0 0.0
        %847 = vmatprep.subr.mxu0 0.0
        %848 = vmatpush1.msra.mxu0 0.0
        %849 = vmatprep.subr.mxu0 0.0
        %850 = vmatpush1.msra.mxu0 0.0
        %851 = vmatprep.subr.mxu0 0.0
        %852 = vmatpush1.msra.mxu0 0.0
        %853 = vmatprep.subr.mxu0 0.0
        %854 = vmatpush1.msra.mxu0 0.0
        %855 = vmatprep.subr.mxu0 0.0
        %856 = vmatpush1.msra.mxu0 0.0
        %857 = vmatprep.subr.mxu0 0.0
        %858 = vmatpush1.msra.mxu0 0.0
        %859 = vmatprep.subr.mxu0 0.0
        %860 = vmatpush1.msra.mxu0 0.0
        %861 = vmatprep.subr.mxu0 0.0
        %862 = vmatpush1.msra.mxu0 0.0
        %863 = vmatprep.subr.mxu0 0.0
        %864 = vmatpush1.msra.mxu0 0.0
        %865 = vmatprep.subr.mxu0 0.0
        %866 = vmatpush1.msra.mxu0 0.0
        %867 = vmatprep.subr.mxu0 0.0
        %868 = vmatpush1.msra.mxu0 0.0
        %869 = vmatprep.subr.mxu0 0.0
        %870 = vmatpush1.msra.mxu0 0.0
        %871 = vmatprep.subr.mxu0 0.0
        %872 = vmatpush1.msra.mxu0 0.0
        %873 = vmatprep.subr.mxu0 0.0
        %874 = vmatpush1.msra.mxu0 0.0
        %875 = vmatprep.subr.mxu0 0.0
        %876 = vmatpush1.msra.mxu0 0.0
        %877 = vmatprep.subr.mxu0 0.0
        %878 = vmatpush1.msra.mxu0 0.0
        %879 = vmatprep.mubr.f32.mxu0 0.0
        %880 = vmatmul.mubr.f32.gmra.mrb[0].mxu0 %v806
        %v881 = vpop.f32.mrb[0].mxu0
        %v882 = vadd.f32 0.0, %v881
        %v883 = vpop.f32.mrb[0].mxu0
        %v884 = vadd.f32 0.0, %v883
        %885 = vmatprep.mubr.f32.mxu0 0.0
        %886 = vmatmul.mubr.f32.gmra.mrb[0].mxu0 %v809
        %v887 = vpop.f32.mrb[0].mxu0
        %v888 = vadd.f32 0.0, %v887
        %v889 = vpop.f32.mrb[0].mxu0
        %v890 = vadd.f32 0.0, %v889
        %891 = vdwg.mxu0
        %v892 = vadd.f32 %v789, %v882
        %v893 = vadd.f32 %v790, %v884
        %v894 = vadd.f32 %v791, %v888
        %v895 = vadd.f32 %v792, %v890
        %896 = vrot.lane.b32.xlu0 %v332, 110
        %v897 = vpop.permute.xlu0 %896
        %898 = vrot.lane.b32.xlu0 %v328, 110
        %v899 = vpop.permute.xlu0 %898
        %900 = vrot.lane.b32.xlu0 %v333, 110
        %v901 = vpop.permute.xlu0 %900
        %vm902 = vcmask 900096
        %v903 = vsel %vm902, %v897, %v899
        %v904 = vsel %vm902, %v899, %v901
        %v907 = vsel %vm573, %v903, 0.0
        %v908 = vsel %vm574, %v904, 0.0
        %s909 = scalar_lea.vmem %s3, 80
        %v910 = vld [vmem:[%s909] sm:$0xff]
        %v911 = vld [vmem:[%s909 + $0x8] sm:$0xff]
        %v913 = vsel %vm233, %v910, 0
        %v916 = vsel %vm233, %v911, 0
        %v919 = vsel %vm237, %v907, 0
        %v922 = vsel %vm237, %v908, 0
        %924 = vmatprep.subr.mxu0 %v922
        %925 = vmatpush1.msra.mxu0 %v919
        %926 = vmatprep.subr.mxu0 0.0
        %927 = vmatpush1.msra.mxu0 0.0
        %928 = vmatprep.subr.mxu0 0.0
        %929 = vmatpush1.msra.mxu0 0.0
        %930 = vmatprep.subr.mxu0 0.0
        %931 = vmatpush1.msra.mxu0 0.0
        %932 = vmatprep.subr.mxu0 0.0
        %933 = vmatpush1.msra.mxu0 0.0
        %934 = vmatprep.subr.mxu0 0.0
        %935 = vmatpush1.msra.mxu0 0.0
        %936 = vmatprep.subr.mxu0 0.0
        %937 = vmatpush1.msra.mxu0 0.0
        %938 = vmatprep.subr.mxu0 0.0
        %939 = vmatpush1.msra.mxu0 0.0
        %940 = vmatprep.subr.mxu0 0.0
        %941 = vmatpush1.msra.mxu0 0.0
        %942 = vmatprep.subr.mxu0 0.0
        %943 = vmatpush1.msra.mxu0 0.0
        %944 = vmatprep.subr.mxu0 0.0
        %945 = vmatpush1.msra.mxu0 0.0
        %946 = vmatprep.subr.mxu0 0.0
        %947 = vmatpush1.msra.mxu0 0.0
        %948 = vmatprep.subr.mxu0 0.0
        %949 = vmatpush1.msra.mxu0 0.0
        %950 = vmatprep.subr.mxu0 0.0
        %951 = vmatpush1.msra.mxu0 0.0
        %952 = vmatprep.subr.mxu0 0.0
        %953 = vmatpush1.msra.mxu0 0.0
        %954 = vmatprep.subr.mxu0 0.0
        %955 = vmatpush1.msra.mxu0 0.0
        %956 = vmatprep.subr.mxu0 0.0
        %957 = vmatpush1.msra.mxu0 0.0
        %958 = vmatprep.subr.mxu0 0.0
        %959 = vmatpush1.msra.mxu0 0.0
        %960 = vmatprep.subr.mxu0 0.0
        %961 = vmatpush1.msra.mxu0 0.0
        %962 = vmatprep.subr.mxu0 0.0
        %963 = vmatpush1.msra.mxu0 0.0
        %964 = vmatprep.subr.mxu0 0.0
        %965 = vmatpush1.msra.mxu0 0.0
        %966 = vmatprep.subr.mxu0 0.0
        %967 = vmatpush1.msra.mxu0 0.0
        %968 = vmatprep.subr.mxu0 0.0
        %969 = vmatpush1.msra.mxu0 0.0
        %970 = vmatprep.subr.mxu0 0.0
        %971 = vmatpush1.msra.mxu0 0.0
        %972 = vmatprep.subr.mxu0 0.0
        %973 = vmatpush1.msra.mxu0 0.0
        %974 = vmatprep.subr.mxu0 0.0
        %975 = vmatpush1.msra.mxu0 0.0
        %976 = vmatprep.subr.mxu0 0.0
        %977 = vmatpush1.msra.mxu0 0.0
        %978 = vmatprep.subr.mxu0 0.0
        %979 = vmatpush1.msra.mxu0 0.0
        %980 = vmatprep.subr.mxu0 0.0
        %981 = vmatpush1.msra.mxu0 0.0
        %982 = vmatprep.subr.mxu0 0.0
        %983 = vmatpush1.msra.mxu0 0.0
        %984 = vmatprep.subr.mxu0 0.0
        %985 = vmatpush1.msra.mxu0 0.0
        %986 = vmatprep.subr.mxu0 0.0
        %987 = vmatpush1.msra.mxu0 0.0
        %988 = vmatprep.mubr.f32.mxu0 0.0
        %989 = vmatmul.mubr.f32.gmra.mrb[0].mxu0 %v913
        %v990 = vpop.f32.mrb[0].mxu0
        %v991 = vadd.f32 0.0, %v990
        %v992 = vpop.f32.mrb[0].mxu0
        %v993 = vadd.f32 0.0, %v992
        %994 = vmatprep.mubr.f32.mxu0 0.0
        %995 = vmatmul.mubr.f32.gmra.mrb[0].mxu0 %v916
        %v996 = vpop.f32.mrb[0].mxu0
        %v997 = vadd.f32 0.0, %v996
        %v998 = vpop.f32.mrb[0].mxu0
        %v999 = vadd.f32 0.0, %v998
        %1000 = vdwg.mxu0
        %v1001 = vadd.f32 %v892, %v991
        %v1002 = vadd.f32 %v893, %v993
        %v1003 = vadd.f32 %v894, %v997
        %v1004 = vadd.f32 %v895, %v999
        %1005 = vrot.lane.b32.xlu0 %v332, 96
        %v1006 = vpop.permute.xlu0 %1005
        %1007 = vrot.lane.b32.xlu0 %v328, 96
        %v1008 = vpop.permute.xlu0 %1007
        %1009 = vrot.lane.b32.xlu0 %v333, 96
        %v1010 = vpop.permute.xlu0 %1009
        %vm1011 = vcmask 785408
        %v1012 = vsel %vm1011, %v1006, %v1008
        %v1013 = vsel %vm1011, %v1008, %v1010
        %v1016 = vsel %vm369, %v1012, 0.0
        %v1017 = vsel %vm370, %v1013, 0.0
        %s1018 = scalar_lea.vmem %s3, 96
        %v1019 = vld [vmem:[%s1018] sm:$0xff]
        %v1020 = vld [vmem:[%s1018 + $0x8] sm:$0xff]
        %v1022 = vsel %vm233, %v1019, 0
        %v1025 = vsel %vm233, %v1020, 0
        %v1028 = vsel %vm237, %v1016, 0
        %v1031 = vsel %vm237, %v1017, 0
        %1033 = vmatprep.subr.mxu0 %v1031
        %1034 = vmatpush1.msra.mxu0 %v1028
        %1035 = vmatprep.subr.mxu0 0.0
        %1036 = vmatpush1.msra.mxu0 0.0
        %1037 = vmatprep.subr.mxu0 0.0
        %1038 = vmatpush1.msra.mxu0 0.0
        %1039 = vmatprep.subr.mxu0 0.0
        %1040 = vmatpush1.msra.mxu0 0.0
        %1041 = vmatprep.subr.mxu0 0.0
        %1042 = vmatpush1.msra.mxu0 0.0
        %1043 = vmatprep.subr.mxu0 0.0
        %1044 = vmatpush1.msra.mxu0 0.0
        %1045 = vmatprep.subr.mxu0 0.0
        %1046 = vmatpush1.msra.mxu0 0.0
        %1047 = vmatprep.subr.mxu0 0.0
        %1048 = vmatpush1.msra.mxu0 0.0
        %1049 = vmatprep.subr.mxu0 0.0
        %1050 = vmatpush1.msra.mxu0 0.0
        %1051 = vmatprep.subr.mxu0 0.0
        %1052 = vmatpush1.msra.mxu0 0.0
        %1053 = vmatprep.subr.mxu0 0.0
        %1054 = vmatpush1.msra.mxu0 0.0
        %1055 = vmatprep.subr.mxu0 0.0
        %1056 = vmatpush1.msra.mxu0 0.0
        %1057 = vmatprep.subr.mxu0 0.0
        %1058 = vmatpush1.msra.mxu0 0.0
        %1059 = vmatprep.subr.mxu0 0.0
        %1060 = vmatpush1.msra.mxu0 0.0
        %1061 = vmatprep.subr.mxu0 0.0
        %1062 = vmatpush1.msra.mxu0 0.0
        %1063 = vmatprep.subr.mxu0 0.0
        %1064 = vmatpush1.msra.mxu0 0.0
        %1065 = vmatprep.subr.mxu0 0.0
        %1066 = vmatpush1.msra.mxu0 0.0
        %1067 = vmatprep.subr.mxu0 0.0
        %1068 = vmatpush1.msra.mxu0 0.0
        %1069 = vmatprep.subr.mxu0 0.0
        %1070 = vmatpush1.msra.mxu0 0.0
        %1071 = vmatprep.subr.mxu0 0.0
        %1072 = vmatpush1.msra.mxu0 0.0
        %1073 = vmatprep.subr.mxu0 0.0
        %1074 = vmatpush1.msra.mxu0 0.0
        %1075 = vmatprep.subr.mxu0 0.0
        %1076 = vmatpush1.msra.mxu0 0.0
        %1077 = vmatprep.subr.mxu0 0.0
        %1078 = vmatpush1.msra.mxu0 0.0
        %1079 = vmatprep.subr.mxu0 0.0
        %1080 = vmatpush1.msra.mxu0 0.0
        %1081 = vmatprep.subr.mxu0 0.0
        %1082 = vmatpush1.msra.mxu0 0.0
        %1083 = vmatprep.subr.mxu0 0.0
        %1084 = vmatpush1.msra.mxu0 0.0
        %1085 = vmatprep.subr.mxu0 0.0
        %1086 = vmatpush1.msra.mxu0 0.0
        %1087 = vmatprep.subr.mxu0 0.0
        %1088 = vmatpush1.msra.mxu0 0.0
        %1089 = vmatprep.subr.mxu0 0.0
        %1090 = vmatpush1.msra.mxu0 0.0
        %1091 = vmatprep.subr.mxu0 0.0
        %1092 = vmatpush1.msra.mxu0 0.0
        %1093 = vmatprep.subr.mxu0 0.0
        %1094 = vmatpush1.msra.mxu0 0.0
        %1095 = vmatprep.subr.mxu0 0.0
        %1096 = vmatpush1.msra.mxu0 0.0
        %1097 = vmatprep.mubr.f32.mxu0 0.0
        %1098 = vmatmul.mubr.f32.gmra.mrb[0].mxu0 %v1022
        %v1099 = vpop.f32.mrb[0].mxu0
        %v1100 = vadd.f32 0.0, %v1099
        %v1101 = vpop.f32.mrb[0].mxu0
        %v1102 = vadd.f32 0.0, %v1101
        %1103 = vmatprep.mubr.f32.mxu0 0.0
        %1104 = vmatmul.mubr.f32.gmra.mrb[0].mxu0 %v1025
        %v1105 = vpop.f32.mrb[0].mxu0
        %v1106 = vadd.f32 0.0, %v1105
        %v1107 = vpop.f32.mrb[0].mxu0
        %v1108 = vadd.f32 0.0, %v1107
        %1109 = vdwg.mxu0
        %v1110 = vadd.f32 %v1001, %v1100
        %v1111 = vadd.f32 %v1002, %v1102
        %v1112 = vadd.f32 %v1003, %v1106
        %v1113 = vadd.f32 %v1004, %v1108
        %s1114 = scalar_lea.vmem %s3, 112
        %v1115 = vld [vmem:[%s1114] sm:$0xff]
        %v1116 = vld [vmem:[%s1114 + $0x8] sm:$0xff]
        %1117 = vrot.lane.b32.xlu0 %v332, 95
        %v1118 = vpop.permute.xlu0 %1117
        %1119 = vrot.lane.b32.xlu0 %v328, 95
        %v1120 = vpop.permute.xlu0 %1119
        %1121 = vrot.lane.b32.xlu0 %v333, 95
        %v1122 = vpop.permute.xlu0 %1121
        %vm1123 = vcmask 777216
        %v1124 = vsel %vm1123, %v1118, %v1120
        %v1125 = vsel %vm1123, %v1120, %v1122
        %v1127 = vsel %vm233, %v1115, 0
        %v1130 = vsel %vm233, %v1116, 0
        %v1132 = vsel %vm237, %v1124, 0
        %v1134 = vsel %vm237, %v1125, 0
        %1136 = vmatprep.subr.mxu0 %v1134
        %1137 = vmatpush1.msra.mxu0 %v1132
        %1138 = vmatprep.subr.mxu0 0.0
        %1139 = vmatpush1.msra.mxu0 0.0
        %1140 = vmatprep.subr.mxu0 0.0
        %1141 = vmatpush1.msra.mxu0 0.0
        %1142 = vmatprep.subr.mxu0 0.0
        %1143 = vmatpush1.msra.mxu0 0.0
        %1144 = vmatprep.subr.mxu0 0.0
        %1145 = vmatpush1.msra.mxu0 0.0
        %1146 = vmatprep.subr.mxu0 0.0
        %1147 = vmatpush1.msra.mxu0 0.0
        %1148 = vmatprep.subr.mxu0 0.0
        %1149 = vmatpush1.msra.mxu0 0.0
        %1150 = vmatprep.subr.mxu0 0.0
        %1151 = vmatpush1.msra.mxu0 0.0
        %1152 = vmatprep.subr.mxu0 0.0
        %1153 = vmatpush1.msra.mxu0 0.0
        %1154 = vmatprep.subr.mxu0 0.0
        %1155 = vmatpush1.msra.mxu0 0.0
        %1156 = vmatprep.subr.mxu0 0.0
        %1157 = vmatpush1.msra.mxu0 0.0
        %1158 = vmatprep.subr.mxu0 0.0
        %1159 = vmatpush1.msra.mxu0 0.0
        %1160 = vmatprep.subr.mxu0 0.0
        %1161 = vmatpush1.msra.mxu0 0.0
        %1162 = vmatprep.subr.mxu0 0.0
        %1163 = vmatpush1.msra.mxu0 0.0
        %1164 = vmatprep.subr.mxu0 0.0
        %1165 = vmatpush1.msra.mxu0 0.0
        %1166 = vmatprep.subr.mxu0 0.0
        %1167 = vmatpush1.msra.mxu0 0.0
        %1168 = vmatprep.subr.mxu0 0.0
        %1169 = vmatpush1.msra.mxu0 0.0
        %1170 = vmatprep.subr.mxu0 0.0
        %1171 = vmatpush1.msra.mxu0 0.0
        %1172 = vmatprep.subr.mxu0 0.0
        %1173 = vmatpush1.msra.mxu0 0.0
        %1174 = vmatprep.subr.mxu0 0.0
        %1175 = vmatpush1.msra.mxu0 0.0
        %1176 = vmatprep.subr.mxu0 0.0
        %1177 = vmatpush1.msra.mxu0 0.0
        %1178 = vmatprep.subr.mxu0 0.0
        %1179 = vmatpush1.msra.mxu0 0.0
        %1180 = vmatprep.subr.mxu0 0.0
        %1181 = vmatpush1.msra.mxu0 0.0
        %1182 = vmatprep.subr.mxu0 0.0
        %1183 = vmatpush1.msra.mxu0 0.0
        %1184 = vmatprep.subr.mxu0 0.0
        %1185 = vmatpush1.msra.mxu0 0.0
        %1186 = vmatprep.subr.mxu0 0.0
        %1187 = vmatpush1.msra.mxu0 0.0
        %1188 = vmatprep.subr.mxu0 0.0
        %1189 = vmatpush1.msra.mxu0 0.0
        %1190 = vmatprep.subr.mxu0 0.0
        %1191 = vmatpush1.msra.mxu0 0.0
        %1192 = vmatprep.subr.mxu0 0.0
        %1193 = vmatpush1.msra.mxu0 0.0
        %1194 = vmatprep.subr.mxu0 0.0
        %1195 = vmatpush1.msra.mxu0 0.0
        %1196 = vmatprep.subr.mxu0 0.0
        %1197 = vmatpush1.msra.mxu0 0.0
        %1198 = vmatprep.subr.mxu0 0.0
        %1199 = vmatpush1.msra.mxu0 0.0
        %1200 = vmatprep.mubr.f32.mxu0 0.0
        %1201 = vmatmul.mubr.f32.gmra.mrb[0].mxu0 %v1127
        %v1202 = vpop.f32.mrb[0].mxu0
        %v1203 = vadd.f32 0.0, %v1202
        %v1204 = vpop.f32.mrb[0].mxu0
        %v1205 = vadd.f32 0.0, %v1204
        %1206 = vmatprep.mubr.f32.mxu0 0.0
        %1207 = vmatmul.mubr.f32.gmra.mrb[0].mxu0 %v1130
        %v1208 = vpop.f32.mrb[0].mxu0
        %v1209 = vadd.f32 0.0, %v1208
        %v1210 = vpop.f32.mrb[0].mxu0
        %v1211 = vadd.f32 0.0, %v1210
        %1212 = vdwg.mxu0
        %v1213 = vadd.f32 %v1110, %v1203
        %v1214 = vadd.f32 %v1111, %v1205
        %v1215 = vadd.f32 %v1112, %v1209
        %v1216 = vadd.f32 %v1113, %v1211
        %1217 = vrot.lane.b32.xlu0 %v332, 94
        %v1218 = vpop.permute.xlu0 %1217
        %1219 = vrot.lane.b32.xlu0 %v328, 94
        %v1220 = vpop.permute.xlu0 %1219
        %1221 = vrot.lane.b32.xlu0 %v333, 94
        %v1222 = vpop.permute.xlu0 %1221
        %vm1223 = vcmask 769024
        %v1224 = vsel %vm1223, %v1218, %v1220
        %v1225 = vsel %vm1223, %v1220, %v1222
        %v1228 = vsel %vm573, %v1224, 0.0
        %v1229 = vsel %vm574, %v1225, 0.0
        %s1230 = scalar_lea.vmem %s3, 128
        %v1231 = vld [vmem:[%s1230] sm:$0xff]
        %v1232 = vld [vmem:[%s1230 + $0x8] sm:$0xff]
        %v1234 = vsel %vm233, %v1231, 0
        %v1237 = vsel %vm233, %v1232, 0
        %v1240 = vsel %vm237, %v1228, 0
        %v1243 = vsel %vm237, %v1229, 0
        %1245 = vmatprep.subr.mxu0 %v1243
        %1246 = vmatpush1.msra.mxu0 %v1240
        %1247 = vmatprep.subr.mxu0 0.0
        %1248 = vmatpush1.msra.mxu0 0.0
        %1249 = vmatprep.subr.mxu0 0.0
        %1250 = vmatpush1.msra.mxu0 0.0
        %1251 = vmatprep.subr.mxu0 0.0
        %1252 = vmatpush1.msra.mxu0 0.0
        %1253 = vmatprep.subr.mxu0 0.0
        %1254 = vmatpush1.msra.mxu0 0.0
        %1255 = vmatprep.subr.mxu0 0.0
        %1256 = vmatpush1.msra.mxu0 0.0
        %1257 = vmatprep.subr.mxu0 0.0
        %1258 = vmatpush1.msra.mxu0 0.0
        %1259 = vmatprep.subr.mxu0 0.0
        %1260 = vmatpush1.msra.mxu0 0.0
        %1261 = vmatprep.subr.mxu0 0.0
        %1262 = vmatpush1.msra.mxu0 0.0
        %1263 = vmatprep.subr.mxu0 0.0
        %1264 = vmatpush1.msra.mxu0 0.0
        %1265 = vmatprep.subr.mxu0 0.0
        %1266 = vmatpush1.msra.mxu0 0.0
        %1267 = vmatprep.subr.mxu0 0.0
        %1268 = vmatpush1.msra.mxu0 0.0
        %1269 = vmatprep.subr.mxu0 0.0
        %1270 = vmatpush1.msra.mxu0 0.0
        %1271 = vmatprep.subr.mxu0 0.0
        %1272 = vmatpush1.msra.mxu0 0.0
        %1273 = vmatprep.subr.mxu0 0.0
        %1274 = vmatpush1.msra.mxu0 0.0
        %1275 = vmatprep.subr.mxu0 0.0
        %1276 = vmatpush1.msra.mxu0 0.0
        %1277 = vmatprep.subr.mxu0 0.0
        %1278 = vmatpush1.msra.mxu0 0.0
        %1279 = vmatprep.subr.mxu0 0.0
        %1280 = vmatpush1.msra.mxu0 0.0
        %1281 = vmatprep.subr.mxu0 0.0
        %1282 = vmatpush1.msra.mxu0 0.0
        %1283 = vmatprep.subr.mxu0 0.0
        %1284 = vmatpush1.msra.mxu0 0.0
        %1285 = vmatprep.subr.mxu0 0.0
        %1286 = vmatpush1.msra.mxu0 0.0
        %1287 = vmatprep.subr.mxu0 0.0
        %1288 = vmatpush1.msra.mxu0 0.0
        %1289 = vmatprep.subr.mxu0 0.0
        %1290 = vmatpush1.msra.mxu0 0.0
        %1291 = vmatprep.subr.mxu0 0.0
        %1292 = vmatpush1.msra.mxu0 0.0
        %1293 = vmatprep.subr.mxu0 0.0
        %1294 = vmatpush1.msra.mxu0 0.0
        %1295 = vmatprep.subr.mxu0 0.0
        %1296 = vmatpush1.msra.mxu0 0.0
        %1297 = vmatprep.subr.mxu0 0.0
        %1298 = vmatpush1.msra.mxu0 0.0
        %1299 = vmatprep.subr.mxu0 0.0
        %1300 = vmatpush1.msra.mxu0 0.0
        %1301 = vmatprep.subr.mxu0 0.0
        %1302 = vmatpush1.msra.mxu0 0.0
        %1303 = vmatprep.subr.mxu0 0.0
        %1304 = vmatpush1.msra.mxu0 0.0
        %1305 = vmatprep.subr.mxu0 0.0
        %1306 = vmatpush1.msra.mxu0 0.0
        %1307 = vmatprep.subr.mxu0 0.0
        %1308 = vmatpush1.msra.mxu0 0.0
        %1309 = vmatprep.mubr.f32.mxu0 0.0
        %1310 = vmatmul.mubr.f32.gmra.mrb[0].mxu0 %v1234
        %v1311 = vpop.f32.mrb[0].mxu0
        %v1312 = vadd.f32 0.0, %v1311
        %v1313 = vpop.f32.mrb[0].mxu0
        %v1314 = vadd.f32 0.0, %v1313
        %1315 = vmatprep.mubr.f32.mxu0 0.0
        %1316 = vmatmul.mubr.f32.gmra.mrb[0].mxu0 %v1237
        %v1317 = vpop.f32.mrb[0].mxu0
        %v1318 = vadd.f32 0.0, %v1317
        %v1319 = vpop.f32.mrb[0].mxu0
        %v1320 = vadd.f32 0.0, %v1319
        %1321 = vdwg.mxu0
        %v1322 = vadd.f32 %v1213, %v1312
        %v1323 = vadd.f32 %v1214, %v1314
        %v1324 = vadd.f32 %v1215, %v1318
        %v1325 = vadd.f32 %v1216, %v1320
        %v1326 = vld [vmem:[%s4] sm:$0xff]
        %v1327 = vld [vmem:[%s4 + $0x8] sm:$0xff]
        %1329 = vset.pattern.permute.xlu0 0
        %1330 = vperm.xlu0 %1329, %v1326
        %v1331 = vpop.permute.xlu0 %1330
        %1334 = vset.pattern.permute.xlu0 0
        %1335 = vperm.xlu0 %1334, %v1327
        %v1336 = vpop.permute.xlu0 %1335
        %v1338 = vadd.f32 %v1322, %v1331
        %v1339 = vadd.f32 %v1323, %v1331
        %v1340 = vadd.f32 %v1324, %v1336
        %v1341 = vadd.f32 %v1325, %v1336
        %v1342 = vmax.f32 %v1338, %v1340
        %v1343 = vmax.f32 %v1339, %v1341
        %1344 = vst [vmem:[%s217] sm:$0xff] %v1342
        %1345 = vst [vmem:[%s217 + $0x8] sm:$0xff] %v1343
        %s1346 = sand.u32 %s137, 1
        %s1347 = scalar_lea.sflag [#allocation3], %s1346
        %s1348 = sand.u32 %s137, 1
        %s1349 = smul.addr %s1348, 16
        %s1350 = scalar_lea.vmem [#allocation2], %s1349
        // Predicated region
        $region41: #{tpu_custom_call.1} parent=39 // pred_check
          %p1351 = pneg %p147
        $region42: #{tpu_custom_call.1} parent=39 // pred_check_branch
          %1353 = sbr.rel (%p1351) target = $region44
        $region43: #{tpu_custom_call.1} parent=39 // pred_region
          %s1355 = ssub.s32 256, 256
          %1356 = vsyncadd %s1347, %s1355
          %s1357 = smul.addr %s19, 2
          %s1358 = smul.addr %s1357, 128
          %s1359 = scalar_lea.hbm %s5, %s1358
          %s1361 = sshll.u32 %s1350, 4
          %s1362 = int_to_ptr.vmem [resolvable:$true] %s1361
          %1364 = dma.vmem_to_hbm [thread:$0]  %s1362, 256, %s1359, %s1347
        $region44: #{tpu_custom_call.1} parent=39 // pred_fallthru
          _
      $region40: #{tpu_custom_call.1} parent=5 // pred_fallthru
        _
      %p1365 = scmp.le.s32.totalorder 2, %s14
      // Predicated region
      $region45: #{tpu_custom_call.1} parent=5 // pred_check
        %p1366 = pneg %p1365
      $region46: #{tpu_custom_call.1} parent=5 // pred_check_branch
        %1368 = sbr.rel (%p1366) target = $region48
      $region47: #{tpu_custom_call.1} parent=5 // pred_region
        %s1369 = ssub.s32 %s14, 2
        // Predicated region
        $region49: #{tpu_custom_call.1} parent=47 // pred_check
          %p1370 = pneg %p153
        $region50: #{tpu_custom_call.1} parent=47 // pred_check_branch
          %1372 = sbr.rel (%p1370) target = $region52
        $region51: #{tpu_custom_call.1} parent=47 // pred_region
          %s1373 = sand.u32 %s138, 1
          %s1374 = scalar_lea.sflag [#allocation3], %s1373
          %s1375 = sand.u32 %s138, 1
          %s1376 = smul.addr %s1375, 16
          %s1377 = scalar_lea.vmem [#allocation2], %s1376
          %1378 = dma.done %s1374, 256
        $region52: #{tpu_custom_call.1} parent=47 // pred_fallthru
          _
      $region48: #{tpu_custom_call.1} parent=5 // pred_fallthru
        _
    $region6: #{tpu_custom_call.1} parent=1 // loop_footer
      %s18 = sadd.s32 1, %s14
    $region7: #{tpu_custom_call.1} parent=1 // loop_footer_branch
      %13 = sbr.rel target = $region3
    $region8: #{tpu_custom_call.1} parent=1 // loop_exit
      _
    %1379 = vsyncpa [#allocation3], 1
    %s1380 = scalar_lea.sflag [#allocation3], 1
    %1381 = vsyncpa %s1380, 1

</llo_original>
